<compile_context>
chip_gen: v6e
topology: v6e:2x2x1
jax: 0.10.0
libtpu: 0.0.40
codegen_flags: <defaults>
</compile_context>

<pallas_src>
import functools

import jax
import jax.numpy as jnp
from jax.experimental import pallas as pl
from jax.experimental.pallas import tpu as pltpu


def _round_up(x, m):
    return ((x + m - 1) // m) * m


def attention_kernel(inp_ref, src_ref, mask_ref, w_in_t_ref, w_ctx_ref, w_inp_ref,
                     out_ref, attn_ref):
    """One batch tile: scores -> masked softmax over S -> context -> output proj."""
    cdt = src_ref.dtype                        # MXU operand (storage) dtype
    inp = inp_ref[...]                         # (tb, D_in)
    src = src_ref[...]                         # (tb, S_pad, D_src)  batch-major
    mask = mask_ref[...]                       # (tb, S_pad) int32: 0 ok, 1 torch mask, 2 S-pad

    # x1 = input @ w_in^T   (MXU, f32 accumulation; weight pre-transposed in wrapper)
    x1 = jnp.dot(inp, w_in_t_ref[...], preferred_element_type=jnp.float32)    # (tb, D_src) f32

    # scores[b, s] = <src[b, s, :], x1[b, :]>  as a batched q=1 matmul on the MXU;
    # avoids materializing the (tb, S, D_src) elementwise temporary of the naive form.
    scores = jnp.einsum('bqd,bsd->bqs', x1[:, None, :].astype(cdt), src,
                        preferred_element_type=jnp.float32)[:, 0, :]          # (tb, S_pad) f32

    # masked_fill_(encoder_padding_mask, 7e-05) — kept bug-for-bug with the module.
    scores = jnp.where(mask == 1, jnp.float32(7e-05), scores)
    # Wrapper-side S padding must receive exactly zero softmax weight.
    scores = jnp.where(mask >= 2, jnp.float32(-1e30), scores)

    # Softmax over source positions (lane axis); the divide goes to the EUP.
    m = jnp.max(scores, axis=-1, keepdims=True)
    e = jnp.exp(scores - m)
    denom = jnp.sum(e, axis=-1, keepdims=True)
    attn = e * pl.reciprocal(denom, approx=True)                              # (tb, S_pad) f32

    # ctx[b, :] = sum_s attn[b, s] * src[b, s, :] — batched q=1 matmul on the MXU
    # (removes the second tile-sized temporary + sublane reduce of the old kernel).
    ctx = jnp.einsum('bqs,bsd->bqd', attn[:, None, :].astype(cdt), src,
                     preferred_element_type=jnp.float32)[:, 0, :]             # (tb, D_src) f32

    # output = tanh(cat([ctx, input]) @ w_out^T) as two dots against weights that
    # were pre-split (and pre-transposed) in the wrapper.
    pre = (jnp.dot(ctx.astype(cdt), w_ctx_ref[...], preferred_element_type=jnp.float32)
           + jnp.dot(inp, w_inp_ref[...], preferred_element_type=jnp.float32))
    out_ref[...] = jnp.tanh(pre)
    attn_ref[...] = attn


def _vmem_budget_bytes():
    """Physical VMEM -> (scoped limit we request, budget we tile against)."""
    try:
        cap = int(pltpu.get_tpu_info().vmem_capacity_bytes)
    except Exception:
        cap = 64 * 1024 * 1024            # conservative fallback: v7x per-TC VMEM
    limit = min(int(cap * 0.85), 100 * 1024 * 1024)
    budget = int(limit * 0.75)            # headroom for compiler temporaries / spill
    return limit, budget


def _derive_batch_tile(B, S_pad, d_in, d_src, d_out_pad, src_bytes, budget):
    """Largest batch tile whose double-buffered working set fits the VMEM budget."""
    # Resident (double-buffered) weights: w_in^T, w_ctx, w_inp.
    weight_bytes = 2 * src_bytes * (d_in * d_src + d_src * d_out_pad + d_in * d_out_pad)
    per_row = (
        2 * S_pad * d_src * src_bytes     # source_hidden tile (dominant, double-buffered)
        + 2 * d_in * src_bytes            # input tile
        + 2 * S_pad * 4                   # int32 mask tile
        + 2 * d_out_pad * 4               # output tile
        + 2 * S_pad * 4                   # attention-score output tile
        + 6 * S_pad * 4                   # scores / exp / attn f32 temporaries
        + 4 * d_src * 4                   # x1 / ctx f32 temporaries
    )
    avail = max(budget - weight_bytes, 8 * per_row)
    tb = max(8, (int(avail // per_row) // 8) * 8)
    if B >= 16:
        # Keep >= 2 grid programs so dimension_semantics=('parallel',) can shard
        # the batch across v7x's two TensorCores.
        tb = min(tb, _round_up(pl.cdiv(B, 2), 8))
    if tb >= B:
        tb = B                            # full batch dim is always a legal block
    return tb


def attention_layer(inp, source_hidden, encoder_padding_mask, w_in, w_out,
                    storage_dtype=jnp.bfloat16):
    """inp: (B, D_in); source_hidden: (S, B, D_src); encoder_padding_mask: (S, B) bool;
    w_in: (D_src, D_in) torch layout; w_out: (D_out, D_src + D_in) torch layout.
    Returns (output (B, D_out) f32, attention_score (S, B) f32) like the module."""
    B, d_in = inp.shape
    S, _, d_src = source_hidden.shape
    d_out = w_out.shape[0]

    # ---- wrapper-side layout plumbing (one-time / fused under jit) ----
    # Lane-dense padding: softmax/attn lane axis S, output lane axis d_out.
    if S % 128 == 0 or S < 128:
        S_pad = _round_up(S, 128)
    else:
        S_pad = _round_up(S, 8)           # avoid large extra HBM reads on huge odd S
    d_out_pad = _round_up(d_out, 128)

    src_bm = jnp.transpose(source_hidden, (1, 0, 2)).astype(storage_dtype)    # (B, S, D_src)
    mask_bm = jnp.transpose(encoder_padding_mask).astype(jnp.int32)           # (B, S)
    if S_pad > S:
        src_bm = jnp.pad(src_bm, ((0, 0), (0, S_pad - S), (0, 0)))
        mask_bm = jnp.pad(mask_bm, ((0, 0), (0, S_pad - S)), constant_values=2)

    inp_s = inp.astype(storage_dtype)
    w_in_t = jnp.transpose(w_in).astype(storage_dtype)                        # (D_in, D_src)
    w_out_t = jnp.transpose(w_out)                                            # (D_src+D_in, D_out)
    w_ctx = jnp.pad(w_out_t[:d_src], ((0, 0), (0, d_out_pad - d_out))).astype(storage_dtype)
    w_inp = jnp.pad(w_out_t[d_src:], ((0, 0), (0, d_out_pad - d_out))).astype(storage_dtype)

    # ---- batch tile from the per-generation VMEM budget ----
    vmem_limit, budget = _vmem_budget_bytes()
    src_bytes = jnp.dtype(storage_dtype).itemsize
    tb = _derive_batch_tile(B, S_pad, d_in, d_src, d_out_pad, src_bytes, budget)
    grid = (pl.cdiv(B, tb),)

    out_p, attn_p = pl.pallas_call(
        attention_kernel,
        out_shape=(
            jax.ShapeDtypeStruct((B, d_out_pad), jnp.float32),
            jax.ShapeDtypeStruct((B, S_pad), jnp.float32),
        ),
        grid=grid,
        in_specs=[
            pl.BlockSpec((tb, d_in), lambda b: (b, 0)),             # input
            pl.BlockSpec((tb, S_pad, d_src), lambda b: (b, 0, 0)),  # source_hidden (batch-major)
            pl.BlockSpec((tb, S_pad), lambda b: (b, 0)),            # padding mask
            pl.BlockSpec((d_in, d_src), lambda b: (0, 0)),          # w_in^T (shared)
            pl.BlockSpec((d_src, d_out_pad), lambda b: (0, 0)),     # w_out^T ctx half (shared)
            pl.BlockSpec((d_in, d_out_pad), lambda b: (0, 0)),      # w_out^T input half (shared)
        ],
        out_specs=(
            pl.BlockSpec((tb, d_out_pad), lambda b: (b, 0)),
            pl.BlockSpec((tb, S_pad), lambda b: (b, 0)),
        ),
        compiler_params=pltpu.CompilerParams(
            dimension_semantics=("parallel",),
            vmem_limit_bytes=vmem_limit,
        ),
    )(inp_s, src_bm, mask_bm, w_in_t, w_ctx, w_inp)

    # Slice off lane padding; return attention in the module's (S, B) layout.
    return out_p[:, :d_out], jnp.transpose(attn_p[:, :S])


attention_layer_bf16 = jax.jit(functools.partial(attention_layer, storage_dtype=jnp.bfloat16))
attention_layer_f32 = jax.jit(functools.partial(attention_layer, storage_dtype=jnp.float32))


def reference(inp, source_hidden, encoder_padding_mask, w_in, w_out):
    # Pure-JAX reference mirroring the PyTorch forward exactly.
    x1 = inp @ w_in.T
    scores = jnp.sum(source_hidden * x1[None], axis=2)
    scores = jnp.where(encoder_padding_mask, jnp.float32(7e-05), scores)
    attn = jax.nn.softmax(scores, axis=0)
    ctx = jnp.sum(attn[:, :, None] * source_hidden, axis=0)
    out = jnp.tanh(jnp.concatenate([ctx, inp], axis=1) @ w_out.T)
    return out, attn


if __name__ == "__main__":
    key = jax.random.PRNGKey(0)
    B, S = 8, 8
    d_in, d_src, d_out = 32, 32, 32

    k1, k2, k3, k4, k5 = jax.random.split(key, 5)
    inp = jax.random.normal(k1, (B, d_in), dtype=jnp.float32)
    source_hidden = jax.random.normal(k2, (S, B, d_src), dtype=jnp.float32)
    encoder_padding_mask = jax.random.bernoulli(k3, p=0.25, shape=(S, B))

    # Deterministic "Linear" weights (bias=False), torch layout (out_features, in_features).
    w_in = jax.random.normal(k4, (d_src, d_in), dtype=jnp.float32) * 0.1
    w_out = jax.random.normal(k5, (d_out, d_src + d_in), dtype=jnp.float32) * 0.1

    ref_out, ref_attn = reference(inp, source_hidden, encoder_padding_mask, w_in, w_out)

    # f32 storage path: structural parity check with the reference.
    out32, attn32 = jax.block_until_ready(
        attention_layer_f32(inp, source_hidden, encoder_padding_mask, w_in, w_out))
    assert jnp.allclose(out32, ref_out, atol=2e-2, rtol=2e-2), "f32 output mismatch"
    assert jnp.allclose(attn32, ref_attn, atol=2e-2, rtol=2e-2), "f32 attention mismatch"

    # bf16 storage path (default / fast): relaxed tolerance for bf16 rounding.
    out16, attn16 = jax.block_until_ready(
        attention_layer_bf16(inp, source_hidden, encoder_padding_mask, w_in, w_out))
    assert jnp.allclose(out16, ref_out, atol=8e-2, rtol=8e-2), "bf16 output mismatch"
    assert jnp.allclose(attn16, ref_attn, atol=8e-2, rtol=8e-2), "bf16 attention mismatch"

    print("KERNEL_OK")
</pallas_src>

<mosaic_0001>
module attributes {stable_mosaic.version = 11 : i64} {
  func.func @attention_kernel(%arg0: i32, %arg1: memref<8x32xf32, #tpu.memory_space<vmem>>, %arg2: memref<8x128x32xf32, #tpu.memory_space<vmem>>, %arg3: memref<8x128xi32, #tpu.memory_space<vmem>>, %arg4: memref<32x32xf32, #tpu.memory_space<vmem>>, %arg5: memref<32x128xf32, #tpu.memory_space<vmem>>, %arg6: memref<32x128xf32, #tpu.memory_space<vmem>>, %arg7: memref<8x128xf32, #tpu.memory_space<vmem>>, %arg8: memref<8x128xf32, #tpu.memory_space<vmem>>) attributes {dimension_semantics = [#tpu.dimension_semantics<parallel>], iteration_bounds = array<i64: 1>, scalar_prefetch = 0 : i64, scratch_operands = 0 : i64, tpu.core_type = #tpu.core_type<tc>, window_params = [{transform_indices = @transform_0, window_bounds = array<i64: 8, 32>}, {transform_indices = @transform_1, window_bounds = array<i64: 8, 128, 32>}, {transform_indices = @transform_2, window_bounds = array<i64: 8, 128>}, {pipeline_mode = #tpu.pipeline_mode<synchronous>, transform_indices = @transform_3, window_bounds = array<i64: 32, 32>}, {pipeline_mode = #tpu.pipeline_mode<synchronous>, transform_indices = @transform_4, window_bounds = array<i64: 32, 128>}, {pipeline_mode = #tpu.pipeline_mode<synchronous>, transform_indices = @transform_5, window_bounds = array<i64: 32, 128>}, {transform_indices = @transform_6, window_bounds = array<i64: 8, 128>}, {transform_indices = @transform_7, window_bounds = array<i64: 8, 128>}]} {
    %c0 = arith.constant 0 : index
    %c0_0 = arith.constant 0 : index
    %0 = vector.load %arg1[%c0, %c0_0] : memref<8x32xf32, #tpu.memory_space<vmem>>, vector<8x32xf32>
    %c0_1 = arith.constant 0 : index
    %c0_2 = arith.constant 0 : index
    %c0_3 = arith.constant 0 : index
    %1 = vector.load %arg2[%c0_1, %c0_2, %c0_3] : memref<8x128x32xf32, #tpu.memory_space<vmem>>, vector<8x128x32xf32>
    %c0_4 = arith.constant 0 : index
    %c0_5 = arith.constant 0 : index
    %2 = vector.load %arg3[%c0_4, %c0_5] : memref<8x128xi32, #tpu.memory_space<vmem>>, vector<8x128xi32>
    %c0_6 = arith.constant 0 : index
    %c0_7 = arith.constant 0 : index
    %3 = vector.load %arg4[%c0_6, %c0_7] : memref<32x32xf32, #tpu.memory_space<vmem>>, vector<32x32xf32>
    %cst = arith.constant dense<0.000000e+00> : vector<8x32xf32>
    %4 = tpu.matmul %0, %3, %cst {dimension_numbers = #tpu.dot_dimension_numbers<[1], [0], [0], [1], [0, 0, 1, 1], [], []>} : vector<8x32xf32>, vector<32x32xf32>, vector<8x32xf32> -> vector<8x32xf32>
    %5 = vector.shape_cast %4 : vector<8x32xf32> to vector<8x1x32xf32>
    "tpu.trace_start"() <{level = 10 : i32, message = "bqd,bsd->bqs"}> : () -> ()
    %cst_8 = arith.constant dense<0.000000e+00> : vector<8x1x128xf32>
    %6 = tpu.matmul %5, %1, %cst_8 {dimension_numbers = #tpu.dot_dimension_numbers<[2], [2], [1], [1], [0, 0, 0, 1, 1, 1], [0], [0]>} : vector<8x1x32xf32>, vector<8x128x32xf32>, vector<8x1x128xf32> -> vector<8x1x128xf32>
    "tpu.trace_stop"() : () -> ()
    %7 = vector.shape_cast %6 : vector<8x1x128xf32> to vector<8x128xf32>
    %c1_i32 = arith.constant 1 : i32
    %8 = vector.broadcast %c1_i32 : i32 to vector<8x128xi32>
    %9 = arith.cmpi eq, %2, %8 : vector<8x128xi32>
    %cst_9 = arith.constant 7.000000e-05 : f32
    %10 = vector.broadcast %cst_9 : f32 to vector<8x128xf32>
    %11 = arith.select %9, %10, %7 : vector<8x128xi1>, vector<8x128xf32>
    %c2_i32 = arith.constant 2 : i32
    %12 = vector.broadcast %c2_i32 : i32 to vector<8x128xi32>
    %13 = arith.cmpi sge, %2, %12 : vector<8x128xi32>
    %cst_10 = arith.constant -1.000000e+30 : f32
    %14 = vector.broadcast %cst_10 : f32 to vector<8x128xf32>
    %15 = arith.select %13, %14, %11 : vector<8x128xi1>, vector<8x128xf32>
    %cst_11 = arith.constant dense<0xFF800000> : vector<8xf32>
    %16 = vector.multi_reduction <maximumf>, %15, %cst_11 [1] : vector<8x128xf32> to vector<8xf32>
    %17 = vector.shape_cast %16 : vector<8xf32> to vector<8x1xf32>
    %18 = vector.broadcast %17 : vector<8x1xf32> to vector<8x128xf32>
    %19 = arith.subf %15, %18 : vector<8x128xf32>
    %20 = math.exp %19 : vector<8x128xf32>
    %cst_12 = arith.constant dense<0.000000e+00> : vector<8xf32>
    %21 = vector.multi_reduction <add>, %20, %cst_12 [1] : vector<8x128xf32> to vector<8xf32>
    %22 = vector.shape_cast %21 : vector<8xf32> to vector<8x1xf32>
    %23 = tpu.reciprocal %22 {approx = true} : vector<8x1xf32> -> vector<8x1xf32>
    %24 = vector.broadcast %23 : vector<8x1xf32> to vector<8x128xf32>
    %25 = arith.mulf %20, %24 : vector<8x128xf32>
    %26 = vector.shape_cast %25 : vector<8x128xf32> to vector<8x1x128xf32>
    "tpu.trace_start"() <{level = 10 : i32, message = "bqs,bsd->bqd"}> : () -> ()
    %cst_13 = arith.constant dense<0.000000e+00> : vector<8x1x32xf32>
    %27 = tpu.matmul %26, %1, %cst_13 {dimension_numbers = #tpu.dot_dimension_numbers<[2], [1], [1], [2], [0, 0, 0, 1, 1, 2], [0], [0]>} : vector<8x1x128xf32>, vector<8x128x32xf32>, vector<8x1x32xf32> -> vector<8x1x32xf32>
    "tpu.trace_stop"() : () -> ()
    %28 = vector.shape_cast %27 : vector<8x1x32xf32> to vector<8x32xf32>
    %c0_14 = arith.constant 0 : index
    %c0_15 = arith.constant 0 : index
    %29 = vector.load %arg5[%c0_14, %c0_15] : memref<32x128xf32, #tpu.memory_space<vmem>>, vector<32x128xf32>
    %cst_16 = arith.constant dense<0.000000e+00> : vector<8x128xf32>
    %30 = tpu.matmul %28, %29, %cst_16 {dimension_numbers = #tpu.dot_dimension_numbers<[1], [0], [0], [1], [0, 0, 1, 1], [], []>} : vector<8x32xf32>, vector<32x128xf32>, vector<8x128xf32> -> vector<8x128xf32>
    %c0_17 = arith.constant 0 : index
    %c0_18 = arith.constant 0 : index
    %31 = vector.load %arg6[%c0_17, %c0_18] : memref<32x128xf32, #tpu.memory_space<vmem>>, vector<32x128xf32>
    %cst_19 = arith.constant dense<0.000000e+00> : vector<8x128xf32>
    %32 = tpu.matmul %0, %31, %cst_19 {dimension_numbers = #tpu.dot_dimension_numbers<[1], [0], [0], [1], [0, 0, 1, 1], [], []>} : vector<8x32xf32>, vector<32x128xf32>, vector<8x128xf32> -> vector<8x128xf32>
    %33 = arith.addf %30, %32 : vector<8x128xf32>
    %34 = math.tanh %33 : vector<8x128xf32>
    %c0_20 = arith.constant 0 : index
    %c0_21 = arith.constant 0 : index
    %35 = vector.load %arg7[%c0_20, %c0_21] : memref<8x128xf32, #tpu.memory_space<vmem>>, vector<8x128xf32>
    tpu.vector_store %arg7[%c0_20, %c0_21], %34 {strides = array<i32>} : memref<8x128xf32, #tpu.memory_space<vmem>>, vector<8x128xf32>,
    %c0_22 = arith.constant 0 : index
    %c0_23 = arith.constant 0 : index
    %36 = vector.load %arg8[%c0_22, %c0_23] : memref<8x128xf32, #tpu.memory_space<vmem>>, vector<8x128xf32>
    tpu.vector_store %arg8[%c0_22, %c0_23], %25 {strides = array<i32>} : memref<8x128xf32, #tpu.memory_space<vmem>>, vector<8x128xf32>,
    return
  }
  func.func @transform_0(%arg0: i32) -> (i32, i32) {
    %c0_i32 = arith.constant 0 : i32
    %c0_i32_0 = arith.constant 0 : i32
    return %arg0, %c0_i32 : i32, i32
  }
  func.func @transform_1(%arg0: i32) -> (i32, i32, i32) {
    %c0_i32 = arith.constant 0 : i32
    %c0_i32_0 = arith.constant 0 : i32
    %c0_i32_1 = arith.constant 0 : i32
    return %arg0, %c0_i32, %c0_i32_0 : i32, i32, i32
  }
  func.func @transform_2(%arg0: i32) -> (i32, i32) {
    %c0_i32 = arith.constant 0 : i32
    %c0_i32_0 = arith.constant 0 : i32
    return %arg0, %c0_i32 : i32, i32
  }
  func.func @transform_3(%arg0: i32) -> (i32, i32) {
    %c0_i32 = arith.constant 0 : i32
    %c0_i32_0 = arith.constant 0 : i32
    %c0_i32_1 = arith.constant 0 : i32
    return %c0_i32, %c0_i32_0 : i32, i32
  }
  func.func @transform_4(%arg0: i32) -> (i32, i32) {
    %c0_i32 = arith.constant 0 : i32
    %c0_i32_0 = arith.constant 0 : i32
    %c0_i32_1 = arith.constant 0 : i32
    return %c0_i32, %c0_i32_0 : i32, i32
  }
  func.func @transform_5(%arg0: i32) -> (i32, i32) {
    %c0_i32 = arith.constant 0 : i32
    %c0_i32_0 = arith.constant 0 : i32
    %c0_i32_1 = arith.constant 0 : i32
    return %c0_i32, %c0_i32_0 : i32, i32
  }
  func.func @transform_6(%arg0: i32) -> (i32, i32) {
    %c0_i32 = arith.constant 0 : i32
    %c0_i32_0 = arith.constant 0 : i32
    return %arg0, %c0_i32 : i32, i32
  }
  func.func @transform_7(%arg0: i32) -> (i32, i32) {
    %c0_i32 = arith.constant 0 : i32
    %c0_i32_0 = arith.constant 0 : i32
    return %arg0, %c0_i32 : i32, i32
  }
}

</mosaic_0001>

<llo_original>
// kernel: attention_layer.1
$region0: #{attention_layer.1}
  #allocation0 [shape = 'u32[]', space=smem, size = 0x4, offset = 0x4, fixed_abs, tag = 'smem constant byte address 0x4 - core index']
  #allocation1 [shape = 'u32[144,128]{1,0:T(1,128)}', space=vmem, size = 0x12000, scoped, tag = 'internal scratch']
  %s0 = inlined_call_operand.vmem [shape: f32[8,32], index: 0, kind: input, shape index: {}]
  %s1 = inlined_call_operand.vmem [shape: f32[8,128,32], index: 1, kind: input, shape index: {}]
  %s2 = inlined_call_operand.vmem [shape: s32[8,128], index: 2, kind: input, shape index: {}]
  %s3 = inlined_call_operand.vmem [shape: f32[32,32], index: 3, kind: input, shape index: {}]
  %s4 = inlined_call_operand.vmem [shape: f32[32,128], index: 4, kind: input, shape index: {}]
  %s5 = inlined_call_operand.vmem [shape: f32[32,128], index: 5, kind: input, shape index: {}]
  %s6 = inlined_call_operand.hbm [shape: f32[8,128], index: 6, kind: output, shape index: {0}]
  %s7 = inlined_call_operand.vmem [shape: f32[8,128], index: 7, kind: output, shape index: {1}]
  %8 = xla_tuple %s6, %s7
  %s9 = sld [smem:[#allocation0]]
  $region42: #{attention_layer.1} parent=0
    _
  %s11 = ssub.s32 1, %s9
  %s12 = scalar_select 0, %s11, %s9
  $region1: #{attention_layer.1} parent=0
    #allocation2 [shape = 'u8[4096]{0}', space=vmem, size = 0x1000, scoped, tag = 'output window, operand 0, single buffered']
    #allocation3 [shape = 's32[1]{0}', space=sflag, size = 0x4, scoped, tag = 'scoped memory for attention_layer.1']
    %13 = vsyncpa [#allocation3], 0
    // Predicated region
    $region2: #{attention_layer.1} parent=1 // pred_check
      _
    $region3: #{attention_layer.1} parent=1 // pred_check_branch
      %15 = sbr.rel (0) target = $region5
    $region4: #{attention_layer.1} parent=1 // pred_region
      _
    $region5: #{attention_layer.1} parent=1 // pred_fallthru
      _
    // Predicated region
    $region6: #{attention_layer.1} parent=1 // pred_check
      _
    $region7: #{attention_layer.1} parent=1 // pred_check_branch
      %17 = sbr.rel (0) target = $region9
    $region8: #{attention_layer.1} parent=1 // pred_region
      _
    $region9: #{attention_layer.1} parent=1 // pred_fallthru
      _
    // Predicated region
    $region10: #{attention_layer.1} parent=1 // pred_check
      _
    $region11: #{attention_layer.1} parent=1 // pred_check_branch
      %19 = sbr.rel (0) target = $region13
    $region12: #{attention_layer.1} parent=1 // pred_region
      _
    $region13: #{attention_layer.1} parent=1 // pred_fallthru
      _
    // Predicated region
    $region14: #{attention_layer.1} parent=1 // pred_check
      _
    $region15: #{attention_layer.1} parent=1 // pred_check_branch
      %21 = sbr.rel (0) target = $region17
    $region16: #{attention_layer.1} parent=1 // pred_region
      _
    $region17: #{attention_layer.1} parent=1 // pred_fallthru
      _
    // Predicated region
    $region18: #{attention_layer.1} parent=1 // pred_check
      _
    $region19: #{attention_layer.1} parent=1 // pred_check_branch
      %23 = sbr.rel (0) target = $region21
    $region20: #{attention_layer.1} parent=1 // pred_region
      _
    $region21: #{attention_layer.1} parent=1 // pred_fallthru
      _
    // Predicated region
    $region22: #{attention_layer.1} parent=1 // pred_check
      _
    $region23: #{attention_layer.1} parent=1 // pred_check_branch
      %25 = sbr.rel (0) target = $region25
    $region24: #{attention_layer.1} parent=1 // pred_region
      _
    $region25: #{attention_layer.1} parent=1 // pred_fallthru
      _
    %v26 = vld [vmem:[%s0] sm:$0xff]
    %v27 = vld [vmem:[%s1] sm:$0xff]
    %v28 = vld [vmem:[%s1 + $0x8] sm:$0xff]
    %v29 = vld [vmem:[%s1 + $0x10] sm:$0xff]
    %v30 = vld [vmem:[%s1 + $0x18] sm:$0xff]
    %v31 = vld [vmem:[%s1 + $0x20] sm:$0xff]
    %v32 = vld [vmem:[%s1 + $0x28] sm:$0xff]
    %v33 = vld [vmem:[%s1 + $0x30] sm:$0xff]
    %v34 = vld [vmem:[%s1 + $0x38] sm:$0xff]
    %v35 = vld [vmem:[%s1 + $0x40] sm:$0xff]
    %v36 = vld [vmem:[%s1 + $0x48] sm:$0xff]
    %v37 = vld [vmem:[%s1 + $0x50] sm:$0xff]
    %v38 = vld [vmem:[%s1 + $0x58] sm:$0xff]
    %v39 = vld [vmem:[%s1 + $0x60] sm:$0xff]
    %v40 = vld [vmem:[%s1 + $0x68] sm:$0xff]
    %v41 = vld [vmem:[%s1 + $0x70] sm:$0xff]
    %v42 = vld [vmem:[%s1 + $0x78] sm:$0xff]
    %v43 = vld [vmem:[%s1 + $0x80] sm:$0xff]
    %v44 = vld [vmem:[%s1 + $0x88] sm:$0xff]
    %v45 = vld [vmem:[%s1 + $0x90] sm:$0xff]
    %v46 = vld [vmem:[%s1 + $0x98] sm:$0xff]
    %v47 = vld [vmem:[%s1 + $0xa0] sm:$0xff]
    %v48 = vld [vmem:[%s1 + $0xa8] sm:$0xff]
    %v49 = vld [vmem:[%s1 + $0xb0] sm:$0xff]
    %v50 = vld [vmem:[%s1 + $0xb8] sm:$0xff]
    %v51 = vld [vmem:[%s1 + $0xc0] sm:$0xff]
    %v52 = vld [vmem:[%s1 + $0xc8] sm:$0xff]
    %v53 = vld [vmem:[%s1 + $0xd0] sm:$0xff]
    %v54 = vld [vmem:[%s1 + $0xd8] sm:$0xff]
    %v55 = vld [vmem:[%s1 + $0xe0] sm:$0xff]
    %v56 = vld [vmem:[%s1 + $0xe8] sm:$0xff]
    %v57 = vld [vmem:[%s1 + $0xf0] sm:$0xff]
    %v58 = vld [vmem:[%s1 + $0xf8] sm:$0xff]
    %v59 = vld [vmem:[%s1 + $0x100] sm:$0xff]
    %v60 = vld [vmem:[%s1 + $0x108] sm:$0xff]
    %v61 = vld [vmem:[%s1 + $0x110] sm:$0xff]
    %v62 = vld [vmem:[%s1 + $0x118] sm:$0xff]
    %v63 = vld [vmem:[%s1 + $0x120] sm:$0xff]
    %v64 = vld [vmem:[%s1 + $0x128] sm:$0xff]
    %v65 = vld [vmem:[%s1 + $0x130] sm:$0xff]
    %v66 = vld [vmem:[%s1 + $0x138] sm:$0xff]
    %v67 = vld [vmem:[%s1 + $0x140] sm:$0xff]
    %v68 = vld [vmem:[%s1 + $0x148] sm:$0xff]
    %v69 = vld [vmem:[%s1 + $0x150] sm:$0xff]
    %v70 = vld [vmem:[%s1 + $0x158] sm:$0xff]
    %v71 = vld [vmem:[%s1 + $0x160] sm:$0xff]
    %v72 = vld [vmem:[%s1 + $0x168] sm:$0xff]
    %v73 = vld [vmem:[%s1 + $0x170] sm:$0xff]
    %v74 = vld [vmem:[%s1 + $0x178] sm:$0xff]
    %v75 = vld [vmem:[%s1 + $0x180] sm:$0xff]
    %v76 = vld [vmem:[%s1 + $0x188] sm:$0xff]
    %v77 = vld [vmem:[%s1 + $0x190] sm:$0xff]
    %v78 = vld [vmem:[%s1 + $0x198] sm:$0xff]
    %v79 = vld [vmem:[%s1 + $0x1a0] sm:$0xff]
    %v80 = vld [vmem:[%s1 + $0x1a8] sm:$0xff]
    %v81 = vld [vmem:[%s1 + $0x1b0] sm:$0xff]
    %v82 = vld [vmem:[%s1 + $0x1b8] sm:$0xff]
    %v83 = vld [vmem:[%s1 + $0x1c0] sm:$0xff]
    %v84 = vld [vmem:[%s1 + $0x1c8] sm:$0xff]
    %v85 = vld [vmem:[%s1 + $0x1d0] sm:$0xff]
    %v86 = vld [vmem:[%s1 + $0x1d8] sm:$0xff]
    %v87 = vld [vmem:[%s1 + $0x1e0] sm:$0xff]
    %v88 = vld [vmem:[%s1 + $0x1e8] sm:$0xff]
    %v89 = vld [vmem:[%s1 + $0x1f0] sm:$0xff]
    %v90 = vld [vmem:[%s1 + $0x1f8] sm:$0xff]
    %v91 = vld [vmem:[%s1 + $0x200] sm:$0xff]
    %v92 = vld [vmem:[%s1 + $0x208] sm:$0xff]
    %v93 = vld [vmem:[%s1 + $0x210] sm:$0xff]
    %v94 = vld [vmem:[%s1 + $0x218] sm:$0xff]
    %v95 = vld [vmem:[%s1 + $0x220] sm:$0xff]
    %v96 = vld [vmem:[%s1 + $0x228] sm:$0xff]
    %v97 = vld [vmem:[%s1 + $0x230] sm:$0xff]
    %v98 = vld [vmem:[%s1 + $0x238] sm:$0xff]
    %v99 = vld [vmem:[%s1 + $0x240] sm:$0xff]
    %v100 = vld [vmem:[%s1 + $0x248] sm:$0xff]
    %v101 = vld [vmem:[%s1 + $0x250] sm:$0xff]
    %v102 = vld [vmem:[%s1 + $0x258] sm:$0xff]
    %v103 = vld [vmem:[%s1 + $0x260] sm:$0xff]
    %v104 = vld [vmem:[%s1 + $0x268] sm:$0xff]
    %v105 = vld [vmem:[%s1 + $0x270] sm:$0xff]
    %v106 = vld [vmem:[%s1 + $0x278] sm:$0xff]
    %v107 = vld [vmem:[%s1 + $0x280] sm:$0xff]
    %v108 = vld [vmem:[%s1 + $0x288] sm:$0xff]
    %v109 = vld [vmem:[%s1 + $0x290] sm:$0xff]
    %v110 = vld [vmem:[%s1 + $0x298] sm:$0xff]
    %v111 = vld [vmem:[%s1 + $0x2a0] sm:$0xff]
    %v112 = vld [vmem:[%s1 + $0x2a8] sm:$0xff]
    %v113 = vld [vmem:[%s1 + $0x2b0] sm:$0xff]
    %v114 = vld [vmem:[%s1 + $0x2b8] sm:$0xff]
    %v115 = vld [vmem:[%s1 + $0x2c0] sm:$0xff]
    %v116 = vld [vmem:[%s1 + $0x2c8] sm:$0xff]
    %v117 = vld [vmem:[%s1 + $0x2d0] sm:$0xff]
    %v118 = vld [vmem:[%s1 + $0x2d8] sm:$0xff]
    %v119 = vld [vmem:[%s1 + $0x2e0] sm:$0xff]
    %v120 = vld [vmem:[%s1 + $0x2e8] sm:$0xff]
    %v121 = vld [vmem:[%s1 + $0x2f0] sm:$0xff]
    %v122 = vld [vmem:[%s1 + $0x2f8] sm:$0xff]
    %v123 = vld [vmem:[%s1 + $0x300] sm:$0xff]
    %v124 = vld [vmem:[%s1 + $0x308] sm:$0xff]
    %v125 = vld [vmem:[%s1 + $0x310] sm:$0xff]
    %v126 = vld [vmem:[%s1 + $0x318] sm:$0xff]
    %v127 = vld [vmem:[%s1 + $0x320] sm:$0xff]
    %v128 = vld [vmem:[%s1 + $0x328] sm:$0xff]
    %v129 = vld [vmem:[%s1 + $0x330] sm:$0xff]
    %v130 = vld [vmem:[%s1 + $0x338] sm:$0xff]
    %v131 = vld [vmem:[%s1 + $0x340] sm:$0xff]
    %v132 = vld [vmem:[%s1 + $0x348] sm:$0xff]
    %v133 = vld [vmem:[%s1 + $0x350] sm:$0xff]
    %v134 = vld [vmem:[%s1 + $0x358] sm:$0xff]
    %v135 = vld [vmem:[%s1 + $0x360] sm:$0xff]
    %v136 = vld [vmem:[%s1 + $0x368] sm:$0xff]
    %v137 = vld [vmem:[%s1 + $0x370] sm:$0xff]
    %v138 = vld [vmem:[%s1 + $0x378] sm:$0xff]
    %v139 = vld [vmem:[%s1 + $0x380] sm:$0xff]
    %v140 = vld [vmem:[%s1 + $0x388] sm:$0xff]
    %v141 = vld [vmem:[%s1 + $0x390] sm:$0xff]
    %v142 = vld [vmem:[%s1 + $0x398] sm:$0xff]
    %v143 = vld [vmem:[%s1 + $0x3a0] sm:$0xff]
    %v144 = vld [vmem:[%s1 + $0x3a8] sm:$0xff]
    %v145 = vld [vmem:[%s1 + $0x3b0] sm:$0xff]
    %v146 = vld [vmem:[%s1 + $0x3b8] sm:$0xff]
    %v147 = vld [vmem:[%s1 + $0x3c0] sm:$0xff]
    %v148 = vld [vmem:[%s1 + $0x3c8] sm:$0xff]
    %v149 = vld [vmem:[%s1 + $0x3d0] sm:$0xff]
    %v150 = vld [vmem:[%s1 + $0x3d8] sm:$0xff]
    %v151 = vld [vmem:[%s1 + $0x3e0] sm:$0xff]
    %v152 = vld [vmem:[%s1 + $0x3e8] sm:$0xff]
    %v153 = vld [vmem:[%s1 + $0x3f0] sm:$0xff]
    %v154 = vld [vmem:[%s1 + $0x3f8] sm:$0xff]
    %v155 = vld [vmem:[%s2] sm:$0xff]
    %v156 = vld [vmem:[%s3] sm:$0xff]
    %v157 = vld [vmem:[%s3 + $0x8] sm:$0xff]
    %v158 = vld [vmem:[%s3 + $0x10] sm:$0xff]
    %v159 = vld [vmem:[%s3 + $0x18] sm:$0xff]
    %vm160 = vcmask 261120
    %v162 = vsel %vm160, %v26, 0
    %164 = vmatprep.subr.mxu0 0.0
    %165 = vmatpush1.msra.mxu0 0.0
    %166 = vmatprep.subr.mxu0 0.0
    %167 = vmatpush1.msra.mxu0 0.0
    %168 = vmatprep.subr.mxu0 0.0
    %169 = vmatpush1.msra.mxu0 0.0
    %170 = vmatprep.subr.mxu0 0.0
    %171 = vmatpush1.msra.mxu0 0.0
    %172 = vmatprep.subr.mxu0 0.0
    %173 = vmatpush1.msra.mxu0 0.0
    %174 = vmatprep.subr.mxu0 0.0
    %175 = vmatpush1.msra.mxu0 0.0
    %176 = vmatprep.subr.mxu0 0.0
    %177 = vmatpush1.msra.mxu0 0.0
    %178 = vmatprep.subr.mxu0 0.0
    %179 = vmatpush1.msra.mxu0 0.0
    %180 = vmatprep.subr.mxu0 0.0
    %181 = vmatpush1.msra.mxu0 0.0
    %182 = vmatprep.subr.mxu0 0.0
    %183 = vmatpush1.msra.mxu0 0.0
    %184 = vmatprep.subr.mxu0 0.0
    %185 = vmatpush1.msra.mxu0 0.0
    %186 = vmatprep.subr.mxu0 0.0
    %187 = vmatpush1.msra.mxu0 0.0
    %188 = vmatprep.subr.mxu0 0.0
    %189 = vmatpush1.msra.mxu0 %v159
    %190 = vmatprep.subr.mxu0 0.0
    %191 = vmatpush1.msra.mxu0 %v158
    %192 = vmatprep.subr.mxu0 0.0
    %193 = vmatpush1.msra.mxu0 %v157
    %194 = vmatprep.subr.mxu0 0.0
    %195 = vmatpush1.msra.mxu0 %v156
    %196 = vmatprep.subr.mxu0 0.0
    %197 = vmatpush2.msra.mxu0 0.0
    %198 = vmatprep.subr.mxu0 0.0
    %199 = vmatpush2.msra.mxu0 0.0
    %200 = vmatprep.subr.mxu0 0.0
    %201 = vmatpush2.msra.mxu0 0.0
    %202 = vmatprep.subr.mxu0 0.0
    %203 = vmatpush2.msra.mxu0 0.0
    %204 = vmatprep.subr.mxu0 0.0
    %205 = vmatpush2.msra.mxu0 0.0
    %206 = vmatprep.subr.mxu0 0.0
    %207 = vmatpush2.msra.mxu0 0.0
    %208 = vmatprep.subr.mxu0 0.0
    %209 = vmatpush2.msra.mxu0 0.0
    %210 = vmatprep.subr.mxu0 0.0
    %211 = vmatpush2.msra.mxu0 0.0
    %212 = vmatprep.subr.mxu0 0.0
    %213 = vmatpush2.msra.mxu0 0.0
    %214 = vmatprep.subr.mxu0 0.0
    %215 = vmatpush2.msra.mxu0 0.0
    %216 = vmatprep.subr.mxu0 0.0
    %217 = vmatpush2.msra.mxu0 0.0
    %218 = vmatprep.subr.mxu0 0.0
    %219 = vmatpush2.msra.mxu0 0.0
    %220 = vmatprep.subr.mxu0 0.0
    %221 = vmatpush2.msra.mxu0 0.0
    %222 = vmatprep.subr.mxu0 0.0
    %223 = vmatpush2.msra.mxu0 0.0
    %224 = vmatprep.subr.mxu0 0.0
    %225 = vmatpush2.msra.mxu0 0.0
    %226 = vmatprep.subr.mxu0 0.0
    %227 = vmatpush2.msra.mxu0 0.0
    %228 = vmatprep.mubr.f32.mxu0 0.0
    %229 = vmatmul.mubr.f32.gmra.mxu0 %v162
    %v230 = vpop.f32.mrf.mxu0
    %v231 = vadd.f32 0.0, %v230
    %v232 = vpop.f32.mrf.mxu0
    %233 = vdwg.mxu0
    %v235 = vcombine.high %v231, %v231
    %v237 = vunpack.c.l.s4 1966171168
    %v238 = vunpack.c.0.s8 %v237
    %v239 = vlaneseq
    %v240 = vshrl.u32 %v239, 7
    %v241 = vsub.s32 %v238, %v240
    %v242 = vrot.slane %v231, %v241
    %v244 = vunpack.c.l.s4 1966171168
    %v245 = vunpack.c.0.s8 %v244
    %v246 = vlaneseq
    %v247 = vshrl.u32 %v246, 7
    %v248 = vsub.s32 %v245, %v247
    %v249 = vrot.slane %v235, %v248
    %v250 = vcombine.high %v242, %v242
    %v251 = vcombine.high %v249, %v249
    %v253 = vunpack.c.l.s4 1966171168
    %v254 = vunpack.c.0.s8 %v253
    %v255 = vlaneseq
    %v256 = vshrl.u32 %v255, 7
    %v257 = vsub.s32 %v254, %v256
    %v258 = vrot.slane %v242, %v257
    %v260 = vunpack.c.l.s4 1966171168
    %v261 = vunpack.c.0.s8 %v260
    %v262 = vlaneseq
    %v263 = vshrl.u32 %v262, 7
    %v264 = vsub.s32 %v261, %v263
    %v265 = vrot.slane %v249, %v264
    %v267 = vunpack.c.l.s4 1966171168
    %v268 = vunpack.c.0.s8 %v267
    %v269 = vlaneseq
    %v270 = vshrl.u32 %v269, 7
    %v271 = vsub.s32 %v268, %v270
    %v272 = vrot.slane %v250, %v271
    %v274 = vunpack.c.l.s4 1966171168
    %v275 = vunpack.c.0.s8 %v274
    %v276 = vlaneseq
    %v277 = vshrl.u32 %v276, 7
    %v278 = vsub.s32 %v275, %v277
    %v279 = vrot.slane %v251, %v278
    %v280 = vcombine.high %v258, %v258
    %v281 = vcombine.high %v265, %v265
    %v282 = vcombine.high %v272, %v272
    %v283 = vcombine.high %v279, %v279
    %v284 = vsel %vm160, %v258, 0
    %v287 = vsel %vm160, %v27, 0
    %v290 = vsel %vm160, %v28, 0
    %v293 = vsel %vm160, %v29, 0
    %v296 = vsel %vm160, %v30, 0
    %v299 = vsel %vm160, %v31, 0
    %v302 = vsel %vm160, %v32, 0
    %v305 = vsel %vm160, %v33, 0
    %v308 = vsel %vm160, %v34, 0
    %v311 = vsel %vm160, %v35, 0
    %v314 = vsel %vm160, %v36, 0
    %v317 = vsel %vm160, %v37, 0
    %v320 = vsel %vm160, %v38, 0
    %v323 = vsel %vm160, %v39, 0
    %v326 = vsel %vm160, %v40, 0
    %v329 = vsel %vm160, %v41, 0
    %v332 = vsel %vm160, %v42, 0
    %334 = vmatprep.subr.mxu0 0.0
    %335 = vmatpush1.xpose.msra.mxu0 %v332
    %336 = vmatprep.subr.mxu0 0.0
    %337 = vmatpush1.xpose.msra.mxu0 %v329
    %338 = vmatprep.subr.mxu0 0.0
    %339 = vmatpush1.xpose.msra.mxu0 %v326
    %340 = vmatprep.subr.mxu0 0.0
    %341 = vmatpush1.xpose.msra.mxu0 %v323
    %342 = vmatprep.subr.mxu0 0.0
    %343 = vmatpush1.xpose.msra.mxu0 %v320
    %344 = vmatprep.subr.mxu0 0.0
    %345 = vmatpush1.xpose.msra.mxu0 %v317
    %346 = vmatprep.subr.mxu0 0.0
    %347 = vmatpush1.xpose.msra.mxu0 %v314
    %348 = vmatprep.subr.mxu0 0.0
    %349 = vmatpush1.xpose.msra.mxu0 %v311
    %350 = vmatprep.subr.mxu0 0.0
    %351 = vmatpush1.xpose.msra.mxu0 %v308
    %352 = vmatprep.subr.mxu0 0.0
    %353 = vmatpush1.xpose.msra.mxu0 %v305
    %354 = vmatprep.subr.mxu0 0.0
    %355 = vmatpush1.xpose.msra.mxu0 %v302
    %356 = vmatprep.subr.mxu0 0.0
    %357 = vmatpush1.xpose.msra.mxu0 %v299
    %358 = vmatprep.subr.mxu0 0.0
    %359 = vmatpush1.xpose.msra.mxu0 %v296
    %360 = vmatprep.subr.mxu0 0.0
    %361 = vmatpush1.xpose.msra.mxu0 %v293
    %362 = vmatprep.subr.mxu0 0.0
    %363 = vmatpush1.xpose.msra.mxu0 %v290
    %364 = vmatprep.subr.mxu0 0.0
    %365 = vmatpush1.xpose.msra.mxu0 %v287
    %366 = vmatprep.subr.mxu0 0.0
    %367 = vmatpush2.xpose.msra.mxu0 0.0
    %368 = vmatprep.subr.mxu0 0.0
    %369 = vmatpush2.xpose.msra.mxu0 0.0
    %370 = vmatprep.subr.mxu0 0.0
    %371 = vmatpush2.xpose.msra.mxu0 0.0
    %372 = vmatprep.subr.mxu0 0.0
    %373 = vmatpush2.xpose.msra.mxu0 0.0
    %374 = vmatprep.subr.mxu0 0.0
    %375 = vmatpush2.xpose.msra.mxu0 0.0
    %376 = vmatprep.subr.mxu0 0.0
    %377 = vmatpush2.xpose.msra.mxu0 0.0
    %378 = vmatprep.subr.mxu0 0.0
    %379 = vmatpush2.xpose.msra.mxu0 0.0
    %380 = vmatprep.subr.mxu0 0.0
    %381 = vmatpush2.xpose.msra.mxu0 0.0
    %382 = vmatprep.subr.mxu0 0.0
    %383 = vmatpush2.xpose.msra.mxu0 0.0
    %384 = vmatprep.subr.mxu0 0.0
    %385 = vmatpush2.xpose.msra.mxu0 0.0
    %386 = vmatprep.subr.mxu0 0.0
    %387 = vmatpush2.xpose.msra.mxu0 0.0
    %388 = vmatprep.subr.mxu0 0.0
    %389 = vmatpush2.xpose.msra.mxu0 0.0
    %390 = vmatprep.subr.mxu0 0.0
    %391 = vmatpush2.xpose.msra.mxu0 0.0
    %392 = vmatprep.subr.mxu0 0.0
    %393 = vmatpush2.xpose.msra.mxu0 0.0
    %394 = vmatprep.subr.mxu0 0.0
    %395 = vmatpush2.xpose.msra.mxu0 0.0
    %396 = vmatprep.subr.mxu0 0.0
    %397 = vmatpush2.xpose.msra.mxu0 0.0
    %398 = vmatprep.mubr.f32.mxu0 0.0
    %399 = vmatmul.mubr.f32.gmra.mxu0 %v284
    %v400 = vpop.f32.mrf.mxu0
    %v401 = vadd.f32 0.0, %v400
    %v402 = vpop.f32.mrf.mxu0
    %403 = vdwg.mxu0
    %v404 = vsel %vm160, %v272, 0
    %v407 = vsel %vm160, %v43, 0
    %v410 = vsel %vm160, %v44, 0
    %v413 = vsel %vm160, %v45, 0
    %v416 = vsel %vm160, %v46, 0
    %v419 = vsel %vm160, %v47, 0
    %v422 = vsel %vm160, %v48, 0
    %v425 = vsel %vm160, %v49, 0
    %v428 = vsel %vm160, %v50, 0
    %v431 = vsel %vm160, %v51, 0
    %v434 = vsel %vm160, %v52, 0
    %v437 = vsel %vm160, %v53, 0
    %v440 = vsel %vm160, %v54, 0
    %v443 = vsel %vm160, %v55, 0
    %v446 = vsel %vm160, %v56, 0
    %v449 = vsel %vm160, %v57, 0
    %v452 = vsel %vm160, %v58, 0
    %454 = vmatprep.subr.mxu0 0.0
    %455 = vmatpush1.xpose.msra.mxu0 %v452
    %456 = vmatprep.subr.mxu0 0.0
    %457 = vmatpush1.xpose.msra.mxu0 %v449
    %458 = vmatprep.subr.mxu0 0.0
    %459 = vmatpush1.xpose.msra.mxu0 %v446
    %460 = vmatprep.subr.mxu0 0.0
    %461 = vmatpush1.xpose.msra.mxu0 %v443
    %462 = vmatprep.subr.mxu0 0.0
    %463 = vmatpush1.xpose.msra.mxu0 %v440
    %464 = vmatprep.subr.mxu0 0.0
    %465 = vmatpush1.xpose.msra.mxu0 %v437
    %466 = vmatprep.subr.mxu0 0.0
    %467 = vmatpush1.xpose.msra.mxu0 %v434
    %468 = vmatprep.subr.mxu0 0.0
    %469 = vmatpush1.xpose.msra.mxu0 %v431
    %470 = vmatprep.subr.mxu0 0.0
    %471 = vmatpush1.xpose.msra.mxu0 %v428
    %472 = vmatprep.subr.mxu0 0.0
    %473 = vmatpush1.xpose.msra.mxu0 %v425
    %474 = vmatprep.subr.mxu0 0.0
    %475 = vmatpush1.xpose.msra.mxu0 %v422
    %476 = vmatprep.subr.mxu0 0.0
    %477 = vmatpush1.xpose.msra.mxu0 %v419
    %478 = vmatprep.subr.mxu0 0.0
    %479 = vmatpush1.xpose.msra.mxu0 %v416
    %480 = vmatprep.subr.mxu0 0.0
    %481 = vmatpush1.xpose.msra.mxu0 %v413
    %482 = vmatprep.subr.mxu0 0.0
    %483 = vmatpush1.xpose.msra.mxu0 %v410
    %484 = vmatprep.subr.mxu0 0.0
    %485 = vmatpush1.xpose.msra.mxu0 %v407
    %486 = vmatprep.subr.mxu0 0.0
    %487 = vmatpush2.xpose.msra.mxu0 0.0
    %488 = vmatprep.subr.mxu0 0.0
    %489 = vmatpush2.xpose.msra.mxu0 0.0
    %490 = vmatprep.subr.mxu0 0.0
    %491 = vmatpush2.xpose.msra.mxu0 0.0
    %492 = vmatprep.subr.mxu0 0.0
    %493 = vmatpush2.xpose.msra.mxu0 0.0
    %494 = vmatprep.subr.mxu0 0.0
    %495 = vmatpush2.xpose.msra.mxu0 0.0
    %496 = vmatprep.subr.mxu0 0.0
    %497 = vmatpush2.xpose.msra.mxu0 0.0
    %498 = vmatprep.subr.mxu0 0.0
    %499 = vmatpush2.xpose.msra.mxu0 0.0
    %500 = vmatprep.subr.mxu0 0.0
    %501 = vmatpush2.xpose.msra.mxu0 0.0
    %502 = vmatprep.subr.mxu0 0.0
    %503 = vmatpush2.xpose.msra.mxu0 0.0
    %504 = vmatprep.subr.mxu0 0.0
    %505 = vmatpush2.xpose.msra.mxu0 0.0
    %506 = vmatprep.subr.mxu0 0.0
    %507 = vmatpush2.xpose.msra.mxu0 0.0
    %508 = vmatprep.subr.mxu0 0.0
    %509 = vmatpush2.xpose.msra.mxu0 0.0
    %510 = vmatprep.subr.mxu0 0.0
    %511 = vmatpush2.xpose.msra.mxu0 0.0
    %512 = vmatprep.subr.mxu0 0.0
    %513 = vmatpush2.xpose.msra.mxu0 0.0
    %514 = vmatprep.subr.mxu0 0.0
    %515 = vmatpush2.xpose.msra.mxu0 0.0
    %516 = vmatprep.subr.mxu0 0.0
    %517 = vmatpush2.xpose.msra.mxu0 0.0
    %518 = vmatprep.mubr.f32.mxu0 0.0
    %519 = vmatmul.mubr.f32.gmra.mxu0 %v404
    %v520 = vpop.f32.mrf.mxu0
    %v521 = vadd.f32 0.0, %v520
    %v522 = vpop.f32.mrf.mxu0
    %523 = vdwg.mxu0
    %v524 = vsel %vm160, %v280, 0
    %v527 = vsel %vm160, %v59, 0
    %v530 = vsel %vm160, %v60, 0
    %v533 = vsel %vm160, %v61, 0
    %v536 = vsel %vm160, %v62, 0
    %v539 = vsel %vm160, %v63, 0
    %v542 = vsel %vm160, %v64, 0
    %v545 = vsel %vm160, %v65, 0
    %v548 = vsel %vm160, %v66, 0
    %v551 = vsel %vm160, %v67, 0
    %v554 = vsel %vm160, %v68, 0
    %v557 = vsel %vm160, %v69, 0
    %v560 = vsel %vm160, %v70, 0
    %v563 = vsel %vm160, %v71, 0
    %v566 = vsel %vm160, %v72, 0
    %v569 = vsel %vm160, %v73, 0
    %v572 = vsel %vm160, %v74, 0
    %574 = vmatprep.subr.mxu0 0.0
    %575 = vmatpush1.xpose.msra.mxu0 %v572
    %576 = vmatprep.subr.mxu0 0.0
    %577 = vmatpush1.xpose.msra.mxu0 %v569
    %578 = vmatprep.subr.mxu0 0.0
    %579 = vmatpush1.xpose.msra.mxu0 %v566
    %580 = vmatprep.subr.mxu0 0.0
    %581 = vmatpush1.xpose.msra.mxu0 %v563
    %582 = vmatprep.subr.mxu0 0.0
    %583 = vmatpush1.xpose.msra.mxu0 %v560
    %584 = vmatprep.subr.mxu0 0.0
    %585 = vmatpush1.xpose.msra.mxu0 %v557
    %586 = vmatprep.subr.mxu0 0.0
    %587 = vmatpush1.xpose.msra.mxu0 %v554
    %588 = vmatprep.subr.mxu0 0.0
    %589 = vmatpush1.xpose.msra.mxu0 %v551
    %590 = vmatprep.subr.mxu0 0.0
    %591 = vmatpush1.xpose.msra.mxu0 %v548
    %592 = vmatprep.subr.mxu0 0.0
    %593 = vmatpush1.xpose.msra.mxu0 %v545
    %594 = vmatprep.subr.mxu0 0.0
    %595 = vmatpush1.xpose.msra.mxu0 %v542
    %596 = vmatprep.subr.mxu0 0.0
    %597 = vmatpush1.xpose.msra.mxu0 %v539
    %598 = vmatprep.subr.mxu0 0.0
    %599 = vmatpush1.xpose.msra.mxu0 %v536
    %600 = vmatprep.subr.mxu0 0.0
    %601 = vmatpush1.xpose.msra.mxu0 %v533
    %602 = vmatprep.subr.mxu0 0.0
    %603 = vmatpush1.xpose.msra.mxu0 %v530
    %604 = vmatprep.subr.mxu0 0.0
    %605 = vmatpush1.xpose.msra.mxu0 %v527
    %606 = vmatprep.subr.mxu0 0.0
    %607 = vmatpush2.xpose.msra.mxu0 0.0
    %608 = vmatprep.subr.mxu0 0.0
    %609 = vmatpush2.xpose.msra.mxu0 0.0
    %610 = vmatprep.subr.mxu0 0.0
    %611 = vmatpush2.xpose.msra.mxu0 0.0
    %612 = vmatprep.subr.mxu0 0.0
    %613 = vmatpush2.xpose.msra.mxu0 0.0
    %614 = vmatprep.subr.mxu0 0.0
    %615 = vmatpush2.xpose.msra.mxu0 0.0
    %616 = vmatprep.subr.mxu0 0.0
    %617 = vmatpush2.xpose.msra.mxu0 0.0
    %618 = vmatprep.subr.mxu0 0.0
    %619 = vmatpush2.xpose.msra.mxu0 0.0
    %620 = vmatprep.subr.mxu0 0.0
    %621 = vmatpush2.xpose.msra.mxu0 0.0
    %622 = vmatprep.subr.mxu0 0.0
    %623 = vmatpush2.xpose.msra.mxu0 0.0
    %624 = vmatprep.subr.mxu0 0.0
    %625 = vmatpush2.xpose.msra.mxu0 0.0
    %626 = vmatprep.subr.mxu0 0.0
    %627 = vmatpush2.xpose.msra.mxu0 0.0
    %628 = vmatprep.subr.mxu0 0.0
    %629 = vmatpush2.xpose.msra.mxu0 0.0
    %630 = vmatprep.subr.mxu0 0.0
    %631 = vmatpush2.xpose.msra.mxu0 0.0
    %632 = vmatprep.subr.mxu0 0.0
    %633 = vmatpush2.xpose.msra.mxu0 0.0
    %634 = vmatprep.subr.mxu0 0.0
    %635 = vmatpush2.xpose.msra.mxu0 0.0
    %636 = vmatprep.subr.mxu0 0.0
    %637 = vmatpush2.xpose.msra.mxu0 0.0
    %638 = vmatprep.mubr.f32.mxu0 0.0
    %639 = vmatmul.mubr.f32.gmra.mxu0 %v524
    %v640 = vpop.f32.mrf.mxu0
    %v641 = vadd.f32 0.0, %v640
    %v642 = vpop.f32.mrf.mxu0
    %643 = vdwg.mxu0
    %v644 = vsel %vm160, %v282, 0
    %v647 = vsel %vm160, %v75, 0
    %v650 = vsel %vm160, %v76, 0
    %v653 = vsel %vm160, %v77, 0
    %v656 = vsel %vm160, %v78, 0
    %v659 = vsel %vm160, %v79, 0
    %v662 = vsel %vm160, %v80, 0
    %v665 = vsel %vm160, %v81, 0
    %v668 = vsel %vm160, %v82, 0
    %v671 = vsel %vm160, %v83, 0
    %v674 = vsel %vm160, %v84, 0
    %v677 = vsel %vm160, %v85, 0
    %v680 = vsel %vm160, %v86, 0
    %v683 = vsel %vm160, %v87, 0
    %v686 = vsel %vm160, %v88, 0
    %v689 = vsel %vm160, %v89, 0
    %v692 = vsel %vm160, %v90, 0
    %694 = vmatprep.subr.mxu0 0.0
    %695 = vmatpush1.xpose.msra.mxu0 %v692
    %696 = vmatprep.subr.mxu0 0.0
    %697 = vmatpush1.xpose.msra.mxu0 %v689
    %698 = vmatprep.subr.mxu0 0.0
    %699 = vmatpush1.xpose.msra.mxu0 %v686
    %700 = vmatprep.subr.mxu0 0.0
    %701 = vmatpush1.xpose.msra.mxu0 %v683
    %702 = vmatprep.subr.mxu0 0.0
    %703 = vmatpush1.xpose.msra.mxu0 %v680
    %704 = vmatprep.subr.mxu0 0.0
    %705 = vmatpush1.xpose.msra.mxu0 %v677
    %706 = vmatprep.subr.mxu0 0.0
    %707 = vmatpush1.xpose.msra.mxu0 %v674
    %708 = vmatprep.subr.mxu0 0.0
    %709 = vmatpush1.xpose.msra.mxu0 %v671
    %710 = vmatprep.subr.mxu0 0.0
    %711 = vmatpush1.xpose.msra.mxu0 %v668
    %712 = vmatprep.subr.mxu0 0.0
    %713 = vmatpush1.xpose.msra.mxu0 %v665
    %714 = vmatprep.subr.mxu0 0.0
    %715 = vmatpush1.xpose.msra.mxu0 %v662
    %716 = vmatprep.subr.mxu0 0.0
    %717 = vmatpush1.xpose.msra.mxu0 %v659
    %718 = vmatprep.subr.mxu0 0.0
    %719 = vmatpush1.xpose.msra.mxu0 %v656
    %720 = vmatprep.subr.mxu0 0.0
    %721 = vmatpush1.xpose.msra.mxu0 %v653
    %722 = vmatprep.subr.mxu0 0.0
    %723 = vmatpush1.xpose.msra.mxu0 %v650
    %724 = vmatprep.subr.mxu0 0.0
    %725 = vmatpush1.xpose.msra.mxu0 %v647
    %726 = vmatprep.subr.mxu0 0.0
    %727 = vmatpush2.xpose.msra.mxu0 0.0
    %728 = vmatprep.subr.mxu0 0.0
    %729 = vmatpush2.xpose.msra.mxu0 0.0
    %730 = vmatprep.subr.mxu0 0.0
    %731 = vmatpush2.xpose.msra.mxu0 0.0
    %732 = vmatprep.subr.mxu0 0.0
    %733 = vmatpush2.xpose.msra.mxu0 0.0
    %734 = vmatprep.subr.mxu0 0.0
    %735 = vmatpush2.xpose.msra.mxu0 0.0
    %736 = vmatprep.subr.mxu0 0.0
    %737 = vmatpush2.xpose.msra.mxu0 0.0
    %738 = vmatprep.subr.mxu0 0.0
    %739 = vmatpush2.xpose.msra.mxu0 0.0
    %740 = vmatprep.subr.mxu0 0.0
    %741 = vmatpush2.xpose.msra.mxu0 0.0
    %742 = vmatprep.subr.mxu0 0.0
    %743 = vmatpush2.xpose.msra.mxu0 0.0
    %744 = vmatprep.subr.mxu0 0.0
    %745 = vmatpush2.xpose.msra.mxu0 0.0
    %746 = vmatprep.subr.mxu0 0.0
    %747 = vmatpush2.xpose.msra.mxu0 0.0
    %748 = vmatprep.subr.mxu0 0.0
    %749 = vmatpush2.xpose.msra.mxu0 0.0
    %750 = vmatprep.subr.mxu0 0.0
    %751 = vmatpush2.xpose.msra.mxu0 0.0
    %752 = vmatprep.subr.mxu0 0.0
    %753 = vmatpush2.xpose.msra.mxu0 0.0
    %754 = vmatprep.subr.mxu0 0.0
    %755 = vmatpush2.xpose.msra.mxu0 0.0
    %756 = vmatprep.subr.mxu0 0.0
    %757 = vmatpush2.xpose.msra.mxu0 0.0
    %758 = vmatprep.mubr.f32.mxu0 0.0
    %759 = vmatmul.mubr.f32.gmra.mxu0 %v644
    %v760 = vpop.f32.mrf.mxu0
    %v761 = vadd.f32 0.0, %v760
    %v762 = vpop.f32.mrf.mxu0
    %763 = vdwg.mxu0
    %v764 = vsel %vm160, %v265, 0
    %v767 = vsel %vm160, %v91, 0
    %v770 = vsel %vm160, %v92, 0
    %v773 = vsel %vm160, %v93, 0
    %v776 = vsel %vm160, %v94, 0
    %v779 = vsel %vm160, %v95, 0
    %v782 = vsel %vm160, %v96, 0
    %v785 = vsel %vm160, %v97, 0
    %v788 = vsel %vm160, %v98, 0
    %v791 = vsel %vm160, %v99, 0
    %v794 = vsel %vm160, %v100, 0
    %v797 = vsel %vm160, %v101, 0
    %v800 = vsel %vm160, %v102, 0
    %v803 = vsel %vm160, %v103, 0
    %v806 = vsel %vm160, %v104, 0
    %v809 = vsel %vm160, %v105, 0
    %v812 = vsel %vm160, %v106, 0
    %814 = vmatprep.subr.mxu0 0.0
    %815 = vmatpush1.xpose.msra.mxu0 %v812
    %816 = vmatprep.subr.mxu0 0.0
    %817 = vmatpush1.xpose.msra.mxu0 %v809
    %818 = vmatprep.subr.mxu0 0.0
    %819 = vmatpush1.xpose.msra.mxu0 %v806
    %820 = vmatprep.subr.mxu0 0.0
    %821 = vmatpush1.xpose.msra.mxu0 %v803
    %822 = vmatprep.subr.mxu0 0.0
    %823 = vmatpush1.xpose.msra.mxu0 %v800
    %824 = vmatprep.subr.mxu0 0.0
    %825 = vmatpush1.xpose.msra.mxu0 %v797
    %826 = vmatprep.subr.mxu0 0.0
    %827 = vmatpush1.xpose.msra.mxu0 %v794
    %828 = vmatprep.subr.mxu0 0.0
    %829 = vmatpush1.xpose.msra.mxu0 %v791
    %830 = vmatprep.subr.mxu0 0.0
    %831 = vmatpush1.xpose.msra.mxu0 %v788
    %832 = vmatprep.subr.mxu0 0.0
    %833 = vmatpush1.xpose.msra.mxu0 %v785
    %834 = vmatprep.subr.mxu0 0.0
    %835 = vmatpush1.xpose.msra.mxu0 %v782
    %836 = vmatprep.subr.mxu0 0.0
    %837 = vmatpush1.xpose.msra.mxu0 %v779
    %838 = vmatprep.subr.mxu0 0.0
    %839 = vmatpush1.xpose.msra.mxu0 %v776
    %840 = vmatprep.subr.mxu0 0.0
    %841 = vmatpush1.xpose.msra.mxu0 %v773
    %842 = vmatprep.subr.mxu0 0.0
    %843 = vmatpush1.xpose.msra.mxu0 %v770
    %844 = vmatprep.subr.mxu0 0.0
    %845 = vmatpush1.xpose.msra.mxu0 %v767
    %846 = vmatprep.subr.mxu0 0.0
    %847 = vmatpush2.xpose.msra.mxu0 0.0
    %848 = vmatprep.subr.mxu0 0.0
    %849 = vmatpush2.xpose.msra.mxu0 0.0
    %850 = vmatprep.subr.mxu0 0.0
    %851 = vmatpush2.xpose.msra.mxu0 0.0
    %852 = vmatprep.subr.mxu0 0.0
    %853 = vmatpush2.xpose.msra.mxu0 0.0
    %854 = vmatprep.subr.mxu0 0.0
    %855 = vmatpush2.xpose.msra.mxu0 0.0
    %856 = vmatprep.subr.mxu0 0.0
    %857 = vmatpush2.xpose.msra.mxu0 0.0
    %858 = vmatprep.subr.mxu0 0.0
    %859 = vmatpush2.xpose.msra.mxu0 0.0
    %860 = vmatprep.subr.mxu0 0.0
    %861 = vmatpush2.xpose.msra.mxu0 0.0
    %862 = vmatprep.subr.mxu0 0.0
    %863 = vmatpush2.xpose.msra.mxu0 0.0
    %864 = vmatprep.subr.mxu0 0.0
    %865 = vmatpush2.xpose.msra.mxu0 0.0
    %866 = vmatprep.subr.mxu0 0.0
    %867 = vmatpush2.xpose.msra.mxu0 0.0
    %868 = vmatprep.subr.mxu0 0.0
    %869 = vmatpush2.xpose.msra.mxu0 0.0
    %870 = vmatprep.subr.mxu0 0.0
    %871 = vmatpush2.xpose.msra.mxu0 0.0
    %872 = vmatprep.subr.mxu0 0.0
    %873 = vmatpush2.xpose.msra.mxu0 0.0
    %874 = vmatprep.subr.mxu0 0.0
    %875 = vmatpush2.xpose.msra.mxu0 0.0
    %876 = vmatprep.subr.mxu0 0.0
    %877 = vmatpush2.xpose.msra.mxu0 0.0
    %878 = vmatprep.mubr.f32.mxu0 0.0
    %879 = vmatmul.mubr.f32.gmra.mxu0 %v764
    %v880 = vpop.f32.mrf.mxu0
    %v881 = vadd.f32 0.0, %v880
    %v882 = vpop.f32.mrf.mxu0
    %883 = vdwg.mxu0
    %v884 = vsel %vm160, %v279, 0
    %v887 = vsel %vm160, %v107, 0
    %v890 = vsel %vm160, %v108, 0
    %v893 = vsel %vm160, %v109, 0
    %v896 = vsel %vm160, %v110, 0
    %v899 = vsel %vm160, %v111, 0
    %v902 = vsel %vm160, %v112, 0
    %v905 = vsel %vm160, %v113, 0
    %v908 = vsel %vm160, %v114, 0
    %v911 = vsel %vm160, %v115, 0
    %v914 = vsel %vm160, %v116, 0
    %v917 = vsel %vm160, %v117, 0
    %v920 = vsel %vm160, %v118, 0
    %v923 = vsel %vm160, %v119, 0
    %v926 = vsel %vm160, %v120, 0
    %v929 = vsel %vm160, %v121, 0
    %v932 = vsel %vm160, %v122, 0
    %934 = vmatprep.subr.mxu0 0.0
    %935 = vmatpush1.xpose.msra.mxu0 %v932
    %936 = vmatprep.subr.mxu0 0.0
    %937 = vmatpush1.xpose.msra.mxu0 %v929
    %938 = vmatprep.subr.mxu0 0.0
    %939 = vmatpush1.xpose.msra.mxu0 %v926
    %940 = vmatprep.subr.mxu0 0.0
    %941 = vmatpush1.xpose.msra.mxu0 %v923
    %942 = vmatprep.subr.mxu0 0.0
    %943 = vmatpush1.xpose.msra.mxu0 %v920
    %944 = vmatprep.subr.mxu0 0.0
    %945 = vmatpush1.xpose.msra.mxu0 %v917
    %946 = vmatprep.subr.mxu0 0.0
    %947 = vmatpush1.xpose.msra.mxu0 %v914
    %948 = vmatprep.subr.mxu0 0.0
    %949 = vmatpush1.xpose.msra.mxu0 %v911
    %950 = vmatprep.subr.mxu0 0.0
    %951 = vmatpush1.xpose.msra.mxu0 %v908
    %952 = vmatprep.subr.mxu0 0.0
    %953 = vmatpush1.xpose.msra.mxu0 %v905
    %954 = vmatprep.subr.mxu0 0.0
    %955 = vmatpush1.xpose.msra.mxu0 %v902
    %956 = vmatprep.subr.mxu0 0.0
    %957 = vmatpush1.xpose.msra.mxu0 %v899
    %958 = vmatprep.subr.mxu0 0.0
    %959 = vmatpush1.xpose.msra.mxu0 %v896
    %960 = vmatprep.subr.mxu0 0.0
    %961 = vmatpush1.xpose.msra.mxu0 %v893
    %962 = vmatprep.subr.mxu0 0.0
    %963 = vmatpush1.xpose.msra.mxu0 %v890
    %964 = vmatprep.subr.mxu0 0.0
    %965 = vmatpush1.xpose.msra.mxu0 %v887
    %966 = vmatprep.subr.mxu0 0.0
    %967 = vmatpush2.xpose.msra.mxu0 0.0
    %968 = vmatprep.subr.mxu0 0.0
    %969 = vmatpush2.xpose.msra.mxu0 0.0
    %970 = vmatprep.subr.mxu0 0.0
    %971 = vmatpush2.xpose.msra.mxu0 0.0
    %972 = vmatprep.subr.mxu0 0.0
    %973 = vmatpush2.xpose.msra.mxu0 0.0
    %974 = vmatprep.subr.mxu0 0.0
    %975 = vmatpush2.xpose.msra.mxu0 0.0
    %976 = vmatprep.subr.mxu0 0.0
    %977 = vmatpush2.xpose.msra.mxu0 0.0
    %978 = vmatprep.subr.mxu0 0.0
    %979 = vmatpush2.xpose.msra.mxu0 0.0
    %980 = vmatprep.subr.mxu0 0.0
    %981 = vmatpush2.xpose.msra.mxu0 0.0
    %982 = vmatprep.subr.mxu0 0.0
    %983 = vmatpush2.xpose.msra.mxu0 0.0
    %984 = vmatprep.subr.mxu0 0.0
    %985 = vmatpush2.xpose.msra.mxu0 0.0
    %986 = vmatprep.subr.mxu0 0.0
    %987 = vmatpush2.xpose.msra.mxu0 0.0
    %988 = vmatprep.subr.mxu0 0.0
    %989 = vmatpush2.xpose.msra.mxu0 0.0
    %990 = vmatprep.subr.mxu0 0.0
    %991 = vmatpush2.xpose.msra.mxu0 0.0
    %992 = vmatprep.subr.mxu0 0.0
    %993 = vmatpush2.xpose.msra.mxu0 0.0
    %994 = vmatprep.subr.mxu0 0.0
    %995 = vmatpush2.xpose.msra.mxu0 0.0
    %996 = vmatprep.subr.mxu0 0.0
    %997 = vmatpush2.xpose.msra.mxu0 0.0
    %998 = vmatprep.mubr.f32.mxu0 0.0
    %999 = vmatmul.mubr.f32.gmra.mxu0 %v884
    %v1000 = vpop.f32.mrf.mxu0
    %v1001 = vadd.f32 0.0, %v1000
    %v1002 = vpop.f32.mrf.mxu0
    %1003 = vdwg.mxu0
    %v1004 = vsel %vm160, %v281, 0
    %v1007 = vsel %vm160, %v123, 0
    %v1010 = vsel %vm160, %v124, 0
    %v1013 = vsel %vm160, %v125, 0
    %v1016 = vsel %vm160, %v126, 0
    %v1019 = vsel %vm160, %v127, 0
    %v1022 = vsel %vm160, %v128, 0
    %v1025 = vsel %vm160, %v129, 0
    %v1028 = vsel %vm160, %v130, 0
    %v1031 = vsel %vm160, %v131, 0
    %v1034 = vsel %vm160, %v132, 0
    %v1037 = vsel %vm160, %v133, 0
    %v1040 = vsel %vm160, %v134, 0
    %v1043 = vsel %vm160, %v135, 0
    %v1046 = vsel %vm160, %v136, 0
    %v1049 = vsel %vm160, %v137, 0
    %v1052 = vsel %vm160, %v138, 0
    %1054 = vmatprep.subr.mxu0 0.0
    %1055 = vmatpush1.xpose.msra.mxu0 %v1052
    %1056 = vmatprep.subr.mxu0 0.0
    %1057 = vmatpush1.xpose.msra.mxu0 %v1049
    %1058 = vmatprep.subr.mxu0 0.0
    %1059 = vmatpush1.xpose.msra.mxu0 %v1046
    %1060 = vmatprep.subr.mxu0 0.0
    %1061 = vmatpush1.xpose.msra.mxu0 %v1043
    %1062 = vmatprep.subr.mxu0 0.0
    %1063 = vmatpush1.xpose.msra.mxu0 %v1040
    %1064 = vmatprep.subr.mxu0 0.0
    %1065 = vmatpush1.xpose.msra.mxu0 %v1037
    %1066 = vmatprep.subr.mxu0 0.0
    %1067 = vmatpush1.xpose.msra.mxu0 %v1034
    %1068 = vmatprep.subr.mxu0 0.0
    %1069 = vmatpush1.xpose.msra.mxu0 %v1031
    %1070 = vmatprep.subr.mxu0 0.0
    %1071 = vmatpush1.xpose.msra.mxu0 %v1028
    %1072 = vmatprep.subr.mxu0 0.0
    %1073 = vmatpush1.xpose.msra.mxu0 %v1025
    %1074 = vmatprep.subr.mxu0 0.0
    %1075 = vmatpush1.xpose.msra.mxu0 %v1022
    %1076 = vmatprep.subr.mxu0 0.0
    %1077 = vmatpush1.xpose.msra.mxu0 %v1019
    %1078 = vmatprep.subr.mxu0 0.0
    %1079 = vmatpush1.xpose.msra.mxu0 %v1016
    %1080 = vmatprep.subr.mxu0 0.0
    %1081 = vmatpush1.xpose.msra.mxu0 %v1013
    %1082 = vmatprep.subr.mxu0 0.0
    %1083 = vmatpush1.xpose.msra.mxu0 %v1010
    %1084 = vmatprep.subr.mxu0 0.0
    %1085 = vmatpush1.xpose.msra.mxu0 %v1007
    %1086 = vmatprep.subr.mxu0 0.0
    %1087 = vmatpush2.xpose.msra.mxu0 0.0
    %1088 = vmatprep.subr.mxu0 0.0
    %1089 = vmatpush2.xpose.msra.mxu0 0.0
    %1090 = vmatprep.subr.mxu0 0.0
    %1091 = vmatpush2.xpose.msra.mxu0 0.0
    %1092 = vmatprep.subr.mxu0 0.0
    %1093 = vmatpush2.xpose.msra.mxu0 0.0
    %1094 = vmatprep.subr.mxu0 0.0
    %1095 = vmatpush2.xpose.msra.mxu0 0.0
    %1096 = vmatprep.subr.mxu0 0.0
    %1097 = vmatpush2.xpose.msra.mxu0 0.0
    %1098 = vmatprep.subr.mxu0 0.0
    %1099 = vmatpush2.xpose.msra.mxu0 0.0
    %1100 = vmatprep.subr.mxu0 0.0
    %1101 = vmatpush2.xpose.msra.mxu0 0.0
    %1102 = vmatprep.subr.mxu0 0.0
    %1103 = vmatpush2.xpose.msra.mxu0 0.0
    %1104 = vmatprep.subr.mxu0 0.0
    %1105 = vmatpush2.xpose.msra.mxu0 0.0
    %1106 = vmatprep.subr.mxu0 0.0
    %1107 = vmatpush2.xpose.msra.mxu0 0.0
    %1108 = vmatprep.subr.mxu0 0.0
    %1109 = vmatpush2.xpose.msra.mxu0 0.0
    %1110 = vmatprep.subr.mxu0 0.0
    %1111 = vmatpush2.xpose.msra.mxu0 0.0
    %1112 = vmatprep.subr.mxu0 0.0
    %1113 = vmatpush2.xpose.msra.mxu0 0.0
    %1114 = vmatprep.subr.mxu0 0.0
    %1115 = vmatpush2.xpose.msra.mxu0 0.0
    %1116 = vmatprep.subr.mxu0 0.0
    %1117 = vmatpush2.xpose.msra.mxu0 0.0
    %1118 = vmatprep.mubr.f32.mxu0 0.0
    %1119 = vmatmul.mubr.f32.gmra.mxu0 %v1004
    %v1120 = vpop.f32.mrf.mxu0
    %v1121 = vadd.f32 0.0, %v1120
    %v1122 = vpop.f32.mrf.mxu0
    %1123 = vdwg.mxu0
    %v1124 = vsel %vm160, %v283, 0
    %v1127 = vsel %vm160, %v139, 0
    %v1130 = vsel %vm160, %v140, 0
    %v1133 = vsel %vm160, %v141, 0
    %v1136 = vsel %vm160, %v142, 0
    %v1139 = vsel %vm160, %v143, 0
    %v1142 = vsel %vm160, %v144, 0
    %v1145 = vsel %vm160, %v145, 0
    %v1148 = vsel %vm160, %v146, 0
    %v1151 = vsel %vm160, %v147, 0
    %v1154 = vsel %vm160, %v148, 0
    %v1157 = vsel %vm160, %v149, 0
    %v1160 = vsel %vm160, %v150, 0
    %v1163 = vsel %vm160, %v151, 0
    %v1166 = vsel %vm160, %v152, 0
    %v1169 = vsel %vm160, %v153, 0
    %v1172 = vsel %vm160, %v154, 0
    %1174 = vmatprep.subr.mxu0 0.0
    %1175 = vmatpush1.xpose.msra.mxu0 %v1172
    %1176 = vmatprep.subr.mxu0 0.0
    %1177 = vmatpush1.xpose.msra.mxu0 %v1169
    %1178 = vmatprep.subr.mxu0 0.0
    %1179 = vmatpush1.xpose.msra.mxu0 %v1166
    %1180 = vmatprep.subr.mxu0 0.0
    %1181 = vmatpush1.xpose.msra.mxu0 %v1163
    %1182 = vmatprep.subr.mxu0 0.0
    %1183 = vmatpush1.xpose.msra.mxu0 %v1160
    %1184 = vmatprep.subr.mxu0 0.0
    %1185 = vmatpush1.xpose.msra.mxu0 %v1157
    %1186 = vmatprep.subr.mxu0 0.0
    %1187 = vmatpush1.xpose.msra.mxu0 %v1154
    %1188 = vmatprep.subr.mxu0 0.0
    %1189 = vmatpush1.xpose.msra.mxu0 %v1151
    %1190 = vmatprep.subr.mxu0 0.0
    %1191 = vmatpush1.xpose.msra.mxu0 %v1148
    %1192 = vmatprep.subr.mxu0 0.0
    %1193 = vmatpush1.xpose.msra.mxu0 %v1145
    %1194 = vmatprep.subr.mxu0 0.0
    %1195 = vmatpush1.xpose.msra.mxu0 %v1142
    %1196 = vmatprep.subr.mxu0 0.0
    %1197 = vmatpush1.xpose.msra.mxu0 %v1139
    %1198 = vmatprep.subr.mxu0 0.0
    %1199 = vmatpush1.xpose.msra.mxu0 %v1136
    %1200 = vmatprep.subr.mxu0 0.0
    %1201 = vmatpush1.xpose.msra.mxu0 %v1133
    %1202 = vmatprep.subr.mxu0 0.0
    %1203 = vmatpush1.xpose.msra.mxu0 %v1130
    %1204 = vmatprep.subr.mxu0 0.0
    %1205 = vmatpush1.xpose.msra.mxu0 %v1127
    %1206 = vmatprep.subr.mxu0 0.0
    %1207 = vmatpush2.xpose.msra.mxu0 0.0
    %1208 = vmatprep.subr.mxu0 0.0
    %1209 = vmatpush2.xpose.msra.mxu0 0.0
    %1210 = vmatprep.subr.mxu0 0.0
    %1211 = vmatpush2.xpose.msra.mxu0 0.0
    %1212 = vmatprep.subr.mxu0 0.0
    %1213 = vmatpush2.xpose.msra.mxu0 0.0
    %1214 = vmatprep.subr.mxu0 0.0
    %1215 = vmatpush2.xpose.msra.mxu0 0.0
    %1216 = vmatprep.subr.mxu0 0.0
    %1217 = vmatpush2.xpose.msra.mxu0 0.0
    %1218 = vmatprep.subr.mxu0 0.0
    %1219 = vmatpush2.xpose.msra.mxu0 0.0
    %1220 = vmatprep.subr.mxu0 0.0
    %1221 = vmatpush2.xpose.msra.mxu0 0.0
    %1222 = vmatprep.subr.mxu0 0.0
    %1223 = vmatpush2.xpose.msra.mxu0 0.0
    %1224 = vmatprep.subr.mxu0 0.0
    %1225 = vmatpush2.xpose.msra.mxu0 0.0
    %1226 = vmatprep.subr.mxu0 0.0
    %1227 = vmatpush2.xpose.msra.mxu0 0.0
    %1228 = vmatprep.subr.mxu0 0.0
    %1229 = vmatpush2.xpose.msra.mxu0 0.0
    %1230 = vmatprep.subr.mxu0 0.0
    %1231 = vmatpush2.xpose.msra.mxu0 0.0
    %1232 = vmatprep.subr.mxu0 0.0
    %1233 = vmatpush2.xpose.msra.mxu0 0.0
    %1234 = vmatprep.subr.mxu0 0.0
    %1235 = vmatpush2.xpose.msra.mxu0 0.0
    %1236 = vmatprep.subr.mxu0 0.0
    %1237 = vmatpush2.xpose.msra.mxu0 0.0
    %1238 = vmatprep.mubr.f32.mxu0 0.0
    %1239 = vmatmul.mubr.f32.gmra.mxu0 %v1124
    %v1240 = vpop.f32.mrf.mxu0
    %v1241 = vadd.f32 0.0, %v1240
    %v1242 = vpop.f32.mrf.mxu0
    %1243 = vdwg.mxu0
    %vm1244 = vcmp.eq.s32.totalorder %v155, 1
    %v1253 = vrot.slane %v521, 7
    %vm1254 = vcmask 1041409
    %v1255 = vsel %vm1254, %v1253, %v401
    %v1256 = vrot.slane %v641, 6
    %vm1257 = vcmask 1042434
    %v1258 = vsel %vm1257, %v1256, %v1255
    %v1259 = vrot.slane %v761, 5
    %vm1260 = vcmask 1043459
    %v1261 = vsel %vm1260, %v1259, %v1258
    %v1262 = vrot.slane %v881, 4
    %vm1263 = vcmask 1044484
    %v1264 = vsel %vm1263, %v1262, %v1261
    %v1265 = vrot.slane %v1001, 3
    %vm1266 = vcmask 1045509
    %v1267 = vsel %vm1266, %v1265, %v1264
    %v1268 = vrot.slane %v1121, 2
    %vm1269 = vcmask 1046534
    %v1270 = vsel %vm1269, %v1268, %v1267
    %v1271 = vrot.slane %v1241, 1
    %vm1272 = vcmask 1047559
    %v1273 = vsel %vm1272, %v1271, %v1270
    %v1275 = vsel %vm1244, 7e-05, %v1273
    %vm1276 = vcmp.ge.s32.totalorder %v155, 2
    %v1277 = vsel %vm1276, -1e+30, %v1275
    %1278 = vmax.xlane.f32.xlu0 %v1277
    %v1279 = vpop.xlane.xlu0 %1278
    %v1280 = vsub.f32 %v1277, %v1279
    %v1281 = vmul.f32 %v1280, 1.442695
    %v1282 = vpow.pop %v1281
    %1283 = vadd.xlane.f32.xlu0 %v1282
    %v1284 = vpop.xlane.xlu0 %1283
    %v1285 = vrcp.pop %v1284
    %v1286 = vmul.f32 %v1282, %v1285
    %v1288 = vcombine.high %v1286, %v1286
    %v1290 = vunpack.c.l.s4 1966171168
    %v1291 = vunpack.c.0.s8 %v1290
    %v1292 = vlaneseq
    %v1293 = vshrl.u32 %v1292, 7
    %v1294 = vsub.s32 %v1291, %v1293
    %v1295 = vrot.slane %v1286, %v1294
    %v1297 = vunpack.c.l.s4 1966171168
    %v1298 = vunpack.c.0.s8 %v1297
    %v1299 = vlaneseq
    %v1300 = vshrl.u32 %v1299, 7
    %v1301 = vsub.s32 %v1298, %v1300
    %v1302 = vrot.slane %v1288, %v1301
    %v1303 = vcombine.high %v1295, %v1295
    %v1304 = vcombine.high %v1302, %v1302
    %v1306 = vunpack.c.l.s4 1966171168
    %v1307 = vunpack.c.0.s8 %v1306
    %v1308 = vlaneseq
    %v1309 = vshrl.u32 %v1308, 7
    %v1310 = vsub.s32 %v1307, %v1309
    %v1311 = vrot.slane %v1295, %v1310
    %v1313 = vunpack.c.l.s4 1966171168
    %v1314 = vunpack.c.0.s8 %v1313
    %v1315 = vlaneseq
    %v1316 = vshrl.u32 %v1315, 7
    %v1317 = vsub.s32 %v1314, %v1316
    %v1318 = vrot.slane %v1302, %v1317
    %v1320 = vunpack.c.l.s4 1966171168
    %v1321 = vunpack.c.0.s8 %v1320
    %v1322 = vlaneseq
    %v1323 = vshrl.u32 %v1322, 7
    %v1324 = vsub.s32 %v1321, %v1323
    %v1325 = vrot.slane %v1303, %v1324
    %v1327 = vunpack.c.l.s4 1966171168
    %v1328 = vunpack.c.0.s8 %v1327
    %v1329 = vlaneseq
    %v1330 = vshrl.u32 %v1329, 7
    %v1331 = vsub.s32 %v1328, %v1330
    %v1332 = vrot.slane %v1304, %v1331
    %v1333 = vcombine.high %v1311, %v1311
    %v1334 = vcombine.high %v1318, %v1318
    %v1335 = vcombine.high %v1325, %v1325
    %v1336 = vcombine.high %v1332, %v1332
    %1345 = vmatprep.subr.mxu0 0.0
    %1346 = vmatpush1.msra.mxu0 %v42
    %1347 = vmatprep.subr.mxu0 0.0
    %1348 = vmatpush1.msra.mxu0 %v41
    %1349 = vmatprep.subr.mxu0 0.0
    %1350 = vmatpush1.msra.mxu0 %v40
    %1351 = vmatprep.subr.mxu0 0.0
    %1352 = vmatpush1.msra.mxu0 %v39
    %1353 = vmatprep.subr.mxu0 0.0
    %1354 = vmatpush1.msra.mxu0 %v38
    %1355 = vmatprep.subr.mxu0 0.0
    %1356 = vmatpush1.msra.mxu0 %v37
    %1357 = vmatprep.subr.mxu0 0.0
    %1358 = vmatpush1.msra.mxu0 %v36
    %1359 = vmatprep.subr.mxu0 0.0
    %1360 = vmatpush1.msra.mxu0 %v35
    %1361 = vmatprep.subr.mxu0 0.0
    %1362 = vmatpush1.msra.mxu0 %v34
    %1363 = vmatprep.subr.mxu0 0.0
    %1364 = vmatpush1.msra.mxu0 %v33
    %1365 = vmatprep.subr.mxu0 0.0
    %1366 = vmatpush1.msra.mxu0 %v32
    %1367 = vmatprep.subr.mxu0 0.0
    %1368 = vmatpush1.msra.mxu0 %v31
    %1369 = vmatprep.subr.mxu0 0.0
    %1370 = vmatpush1.msra.mxu0 %v30
    %1371 = vmatprep.subr.mxu0 0.0
    %1372 = vmatpush1.msra.mxu0 %v29
    %1373 = vmatprep.subr.mxu0 0.0
    %1374 = vmatpush1.msra.mxu0 %v28
    %1375 = vmatprep.subr.mxu0 0.0
    %1376 = vmatpush1.msra.mxu0 %v27
    %1377 = vmatprep.subr.mxu0 0.0
    %1378 = vmatpush2.msra.mxu0 0.0
    %1379 = vmatprep.subr.mxu0 0.0
    %1380 = vmatpush2.msra.mxu0 0.0
    %1381 = vmatprep.subr.mxu0 0.0
    %1382 = vmatpush2.msra.mxu0 0.0
    %1383 = vmatprep.subr.mxu0 0.0
    %1384 = vmatpush2.msra.mxu0 0.0
    %1385 = vmatprep.subr.mxu0 0.0
    %1386 = vmatpush2.msra.mxu0 0.0
    %1387 = vmatprep.subr.mxu0 0.0
    %1388 = vmatpush2.msra.mxu0 0.0
    %1389 = vmatprep.subr.mxu0 0.0
    %1390 = vmatpush2.msra.mxu0 0.0
    %1391 = vmatprep.subr.mxu0 0.0
    %1392 = vmatpush2.msra.mxu0 0.0
    %1393 = vmatprep.subr.mxu0 0.0
    %1394 = vmatpush2.msra.mxu0 0.0
    %1395 = vmatprep.subr.mxu0 0.0
    %1396 = vmatpush2.msra.mxu0 0.0
    %1397 = vmatprep.subr.mxu0 0.0
    %1398 = vmatpush2.msra.mxu0 0.0
    %1399 = vmatprep.subr.mxu0 0.0
    %1400 = vmatpush2.msra.mxu0 0.0
    %1401 = vmatprep.subr.mxu0 0.0
    %1402 = vmatpush2.msra.mxu0 0.0
    %1403 = vmatprep.subr.mxu0 0.0
    %1404 = vmatpush2.msra.mxu0 0.0
    %1405 = vmatprep.subr.mxu0 0.0
    %1406 = vmatpush2.msra.mxu0 0.0
    %1407 = vmatprep.subr.mxu0 0.0
    %1408 = vmatpush2.msra.mxu0 0.0
    %1409 = vmatprep.mubr.f32.mxu0 0.0
    %1410 = vmatmul.mubr.f32.gmra.mxu0 %v1311
    %v1411 = vpop.f32.mrf.mxu0
    %v1412 = vadd.f32 0.0, %v1411
    %v1413 = vpop.f32.mrf.mxu0
    %1414 = vdwg.mxu0
    %1415 = vmatprep.subr.mxu0 0.0
    %1416 = vmatpush1.msra.mxu0 %v58
    %1417 = vmatprep.subr.mxu0 0.0
    %1418 = vmatpush1.msra.mxu0 %v57
    %1419 = vmatprep.subr.mxu0 0.0
    %1420 = vmatpush1.msra.mxu0 %v56
    %1421 = vmatprep.subr.mxu0 0.0
    %1422 = vmatpush1.msra.mxu0 %v55
    %1423 = vmatprep.subr.mxu0 0.0
    %1424 = vmatpush1.msra.mxu0 %v54
    %1425 = vmatprep.subr.mxu0 0.0
    %1426 = vmatpush1.msra.mxu0 %v53
    %1427 = vmatprep.subr.mxu0 0.0
    %1428 = vmatpush1.msra.mxu0 %v52
    %1429 = vmatprep.subr.mxu0 0.0
    %1430 = vmatpush1.msra.mxu0 %v51
    %1431 = vmatprep.subr.mxu0 0.0
    %1432 = vmatpush1.msra.mxu0 %v50
    %1433 = vmatprep.subr.mxu0 0.0
    %1434 = vmatpush1.msra.mxu0 %v49
    %1435 = vmatprep.subr.mxu0 0.0
    %1436 = vmatpush1.msra.mxu0 %v48
    %1437 = vmatprep.subr.mxu0 0.0
    %1438 = vmatpush1.msra.mxu0 %v47
    %1439 = vmatprep.subr.mxu0 0.0
    %1440 = vmatpush1.msra.mxu0 %v46
    %1441 = vmatprep.subr.mxu0 0.0
    %1442 = vmatpush1.msra.mxu0 %v45
    %1443 = vmatprep.subr.mxu0 0.0
    %1444 = vmatpush1.msra.mxu0 %v44
    %1445 = vmatprep.subr.mxu0 0.0
    %1446 = vmatpush1.msra.mxu0 %v43
    %1447 = vmatprep.subr.mxu0 0.0
    %1448 = vmatpush2.msra.mxu0 0.0
    %1449 = vmatprep.subr.mxu0 0.0
    %1450 = vmatpush2.msra.mxu0 0.0
    %1451 = vmatprep.subr.mxu0 0.0
    %1452 = vmatpush2.msra.mxu0 0.0
    %1453 = vmatprep.subr.mxu0 0.0
    %1454 = vmatpush2.msra.mxu0 0.0
    %1455 = vmatprep.subr.mxu0 0.0
    %1456 = vmatpush2.msra.mxu0 0.0
    %1457 = vmatprep.subr.mxu0 0.0
    %1458 = vmatpush2.msra.mxu0 0.0
    %1459 = vmatprep.subr.mxu0 0.0
    %1460 = vmatpush2.msra.mxu0 0.0
    %1461 = vmatprep.subr.mxu0 0.0
    %1462 = vmatpush2.msra.mxu0 0.0
    %1463 = vmatprep.subr.mxu0 0.0
    %1464 = vmatpush2.msra.mxu0 0.0
    %1465 = vmatprep.subr.mxu0 0.0
    %1466 = vmatpush2.msra.mxu0 0.0
    %1467 = vmatprep.subr.mxu0 0.0
    %1468 = vmatpush2.msra.mxu0 0.0
    %1469 = vmatprep.subr.mxu0 0.0
    %1470 = vmatpush2.msra.mxu0 0.0
    %1471 = vmatprep.subr.mxu0 0.0
    %1472 = vmatpush2.msra.mxu0 0.0
    %1473 = vmatprep.subr.mxu0 0.0
    %1474 = vmatpush2.msra.mxu0 0.0
    %1475 = vmatprep.subr.mxu0 0.0
    %1476 = vmatpush2.msra.mxu0 0.0
    %1477 = vmatprep.subr.mxu0 0.0
    %1478 = vmatpush2.msra.mxu0 0.0
    %1479 = vmatprep.mubr.f32.mxu0 0.0
    %1480 = vmatmul.mubr.f32.gmra.mxu0 %v1325
    %v1481 = vpop.f32.mrf.mxu0
    %v1482 = vadd.f32 0.0, %v1481
    %v1483 = vpop.f32.mrf.mxu0
    %1484 = vdwg.mxu0
    %1485 = vmatprep.subr.mxu0 0.0
    %1486 = vmatpush1.msra.mxu0 %v74
    %1487 = vmatprep.subr.mxu0 0.0
    %1488 = vmatpush1.msra.mxu0 %v73
    %1489 = vmatprep.subr.mxu0 0.0
    %1490 = vmatpush1.msra.mxu0 %v72
    %1491 = vmatprep.subr.mxu0 0.0
    %1492 = vmatpush1.msra.mxu0 %v71
    %1493 = vmatprep.subr.mxu0 0.0
    %1494 = vmatpush1.msra.mxu0 %v70
    %1495 = vmatprep.subr.mxu0 0.0
    %1496 = vmatpush1.msra.mxu0 %v69
    %1497 = vmatprep.subr.mxu0 0.0
    %1498 = vmatpush1.msra.mxu0 %v68
    %1499 = vmatprep.subr.mxu0 0.0
    %1500 = vmatpush1.msra.mxu0 %v67
    %1501 = vmatprep.subr.mxu0 0.0
    %1502 = vmatpush1.msra.mxu0 %v66
    %1503 = vmatprep.subr.mxu0 0.0
    %1504 = vmatpush1.msra.mxu0 %v65
    %1505 = vmatprep.subr.mxu0 0.0
    %1506 = vmatpush1.msra.mxu0 %v64
    %1507 = vmatprep.subr.mxu0 0.0
    %1508 = vmatpush1.msra.mxu0 %v63
    %1509 = vmatprep.subr.mxu0 0.0
    %1510 = vmatpush1.msra.mxu0 %v62
    %1511 = vmatprep.subr.mxu0 0.0
    %1512 = vmatpush1.msra.mxu0 %v61
    %1513 = vmatprep.subr.mxu0 0.0
    %1514 = vmatpush1.msra.mxu0 %v60
    %1515 = vmatprep.subr.mxu0 0.0
    %1516 = vmatpush1.msra.mxu0 %v59
    %1517 = vmatprep.subr.mxu0 0.0
    %1518 = vmatpush2.msra.mxu0 0.0
    %1519 = vmatprep.subr.mxu0 0.0
    %1520 = vmatpush2.msra.mxu0 0.0
    %1521 = vmatprep.subr.mxu0 0.0
    %1522 = vmatpush2.msra.mxu0 0.0
    %1523 = vmatprep.subr.mxu0 0.0
    %1524 = vmatpush2.msra.mxu0 0.0
    %1525 = vmatprep.subr.mxu0 0.0
    %1526 = vmatpush2.msra.mxu0 0.0
    %1527 = vmatprep.subr.mxu0 0.0
    %1528 = vmatpush2.msra.mxu0 0.0
    %1529 = vmatprep.subr.mxu0 0.0
    %1530 = vmatpush2.msra.mxu0 0.0
    %1531 = vmatprep.subr.mxu0 0.0
    %1532 = vmatpush2.msra.mxu0 0.0
    %1533 = vmatprep.subr.mxu0 0.0
    %1534 = vmatpush2.msra.mxu0 0.0
    %1535 = vmatprep.subr.mxu0 0.0
    %1536 = vmatpush2.msra.mxu0 0.0
    %1537 = vmatprep.subr.mxu0 0.0
    %1538 = vmatpush2.msra.mxu0 0.0
    %1539 = vmatprep.subr.mxu0 0.0
    %1540 = vmatpush2.msra.mxu0 0.0
    %1541 = vmatprep.subr.mxu0 0.0
    %1542 = vmatpush2.msra.mxu0 0.0
    %1543 = vmatprep.subr.mxu0 0.0
    %1544 = vmatpush2.msra.mxu0 0.0
    %1545 = vmatprep.subr.mxu0 0.0
    %1546 = vmatpush2.msra.mxu0 0.0
    %1547 = vmatprep.subr.mxu0 0.0
    %1548 = vmatpush2.msra.mxu0 0.0
    %1549 = vmatprep.mubr.f32.mxu0 0.0
    %1550 = vmatmul.mubr.f32.gmra.mxu0 %v1333
    %v1551 = vpop.f32.mrf.mxu0
    %v1552 = vadd.f32 0.0, %v1551
    %v1553 = vpop.f32.mrf.mxu0
    %1554 = vdwg.mxu0
    %1555 = vmatprep.subr.mxu0 0.0
    %1556 = vmatpush1.msra.mxu0 %v90
    %1557 = vmatprep.subr.mxu0 0.0
    %1558 = vmatpush1.msra.mxu0 %v89
    %1559 = vmatprep.subr.mxu0 0.0
    %1560 = vmatpush1.msra.mxu0 %v88
    %1561 = vmatprep.subr.mxu0 0.0
    %1562 = vmatpush1.msra.mxu0 %v87
    %1563 = vmatprep.subr.mxu0 0.0
    %1564 = vmatpush1.msra.mxu0 %v86
    %1565 = vmatprep.subr.mxu0 0.0
    %1566 = vmatpush1.msra.mxu0 %v85
    %1567 = vmatprep.subr.mxu0 0.0
    %1568 = vmatpush1.msra.mxu0 %v84
    %1569 = vmatprep.subr.mxu0 0.0
    %1570 = vmatpush1.msra.mxu0 %v83
    %1571 = vmatprep.subr.mxu0 0.0
    %1572 = vmatpush1.msra.mxu0 %v82
    %1573 = vmatprep.subr.mxu0 0.0
    %1574 = vmatpush1.msra.mxu0 %v81
    %1575 = vmatprep.subr.mxu0 0.0
    %1576 = vmatpush1.msra.mxu0 %v80
    %1577 = vmatprep.subr.mxu0 0.0
    %1578 = vmatpush1.msra.mxu0 %v79
    %1579 = vmatprep.subr.mxu0 0.0
    %1580 = vmatpush1.msra.mxu0 %v78
    %1581 = vmatprep.subr.mxu0 0.0
    %1582 = vmatpush1.msra.mxu0 %v77
    %1583 = vmatprep.subr.mxu0 0.0
    %1584 = vmatpush1.msra.mxu0 %v76
    %1585 = vmatprep.subr.mxu0 0.0
    %1586 = vmatpush1.msra.mxu0 %v75
    %1587 = vmatprep.subr.mxu0 0.0
    %1588 = vmatpush2.msra.mxu0 0.0
    %1589 = vmatprep.subr.mxu0 0.0
    %1590 = vmatpush2.msra.mxu0 0.0
    %1591 = vmatprep.subr.mxu0 0.0
    %1592 = vmatpush2.msra.mxu0 0.0
    %1593 = vmatprep.subr.mxu0 0.0
    %1594 = vmatpush2.msra.mxu0 0.0
    %1595 = vmatprep.subr.mxu0 0.0
    %1596 = vmatpush2.msra.mxu0 0.0
    %1597 = vmatprep.subr.mxu0 0.0
    %1598 = vmatpush2.msra.mxu0 0.0
    %1599 = vmatprep.subr.mxu0 0.0
    %1600 = vmatpush2.msra.mxu0 0.0
    %1601 = vmatprep.subr.mxu0 0.0
    %1602 = vmatpush2.msra.mxu0 0.0
    %1603 = vmatprep.subr.mxu0 0.0
    %1604 = vmatpush2.msra.mxu0 0.0
    %1605 = vmatprep.subr.mxu0 0.0
    %1606 = vmatpush2.msra.mxu0 0.0
    %1607 = vmatprep.subr.mxu0 0.0
    %1608 = vmatpush2.msra.mxu0 0.0
    %1609 = vmatprep.subr.mxu0 0.0
    %1610 = vmatpush2.msra.mxu0 0.0
    %1611 = vmatprep.subr.mxu0 0.0
    %1612 = vmatpush2.msra.mxu0 0.0
    %1613 = vmatprep.subr.mxu0 0.0
    %1614 = vmatpush2.msra.mxu0 0.0
    %1615 = vmatprep.subr.mxu0 0.0
    %1616 = vmatpush2.msra.mxu0 0.0
    %1617 = vmatprep.subr.mxu0 0.0
    %1618 = vmatpush2.msra.mxu0 0.0
    %1619 = vmatprep.mubr.f32.mxu0 0.0
    %1620 = vmatmul.mubr.f32.gmra.mxu0 %v1335
    %v1621 = vpop.f32.mrf.mxu0
    %v1622 = vadd.f32 0.0, %v1621
    %v1623 = vpop.f32.mrf.mxu0
    %1624 = vdwg.mxu0
    %1625 = vmatprep.subr.mxu0 0.0
    %1626 = vmatpush1.msra.mxu0 %v106
    %1627 = vmatprep.subr.mxu0 0.0
    %1628 = vmatpush1.msra.mxu0 %v105
    %1629 = vmatprep.subr.mxu0 0.0
    %1630 = vmatpush1.msra.mxu0 %v104
    %1631 = vmatprep.subr.mxu0 0.0
    %1632 = vmatpush1.msra.mxu0 %v103
    %1633 = vmatprep.subr.mxu0 0.0
    %1634 = vmatpush1.msra.mxu0 %v102
    %1635 = vmatprep.subr.mxu0 0.0
    %1636 = vmatpush1.msra.mxu0 %v101
    %1637 = vmatprep.subr.mxu0 0.0
    %1638 = vmatpush1.msra.mxu0 %v100
    %1639 = vmatprep.subr.mxu0 0.0
    %1640 = vmatpush1.msra.mxu0 %v99
    %1641 = vmatprep.subr.mxu0 0.0
    %1642 = vmatpush1.msra.mxu0 %v98
    %1643 = vmatprep.subr.mxu0 0.0
    %1644 = vmatpush1.msra.mxu0 %v97
    %1645 = vmatprep.subr.mxu0 0.0
    %1646 = vmatpush1.msra.mxu0 %v96
    %1647 = vmatprep.subr.mxu0 0.0
    %1648 = vmatpush1.msra.mxu0 %v95
    %1649 = vmatprep.subr.mxu0 0.0
    %1650 = vmatpush1.msra.mxu0 %v94
    %1651 = vmatprep.subr.mxu0 0.0
    %1652 = vmatpush1.msra.mxu0 %v93
    %1653 = vmatprep.subr.mxu0 0.0
    %1654 = vmatpush1.msra.mxu0 %v92
    %1655 = vmatprep.subr.mxu0 0.0
    %1656 = vmatpush1.msra.mxu0 %v91
    %1657 = vmatprep.subr.mxu0 0.0
    %1658 = vmatpush2.msra.mxu0 0.0
    %1659 = vmatprep.subr.mxu0 0.0
    %1660 = vmatpush2.msra.mxu0 0.0
    %1661 = vmatprep.subr.mxu0 0.0
    %1662 = vmatpush2.msra.mxu0 0.0
    %1663 = vmatprep.subr.mxu0 0.0
    %1664 = vmatpush2.msra.mxu0 0.0
    %1665 = vmatprep.subr.mxu0 0.0
    %1666 = vmatpush2.msra.mxu0 0.0
    %1667 = vmatprep.subr.mxu0 0.0
    %1668 = vmatpush2.msra.mxu0 0.0
    %1669 = vmatprep.subr.mxu0 0.0
    %1670 = vmatpush2.msra.mxu0 0.0
    %1671 = vmatprep.subr.mxu0 0.0
    %1672 = vmatpush2.msra.mxu0 0.0
    %1673 = vmatprep.subr.mxu0 0.0
    %1674 = vmatpush2.msra.mxu0 0.0
    %1675 = vmatprep.subr.mxu0 0.0
    %1676 = vmatpush2.msra.mxu0 0.0
    %1677 = vmatprep.subr.mxu0 0.0
    %1678 = vmatpush2.msra.mxu0 0.0
    %1679 = vmatprep.subr.mxu0 0.0
    %1680 = vmatpush2.msra.mxu0 0.0
    %1681 = vmatprep.subr.mxu0 0.0
    %1682 = vmatpush2.msra.mxu0 0.0
    %1683 = vmatprep.subr.mxu0 0.0
    %1684 = vmatpush2.msra.mxu0 0.0
    %1685 = vmatprep.subr.mxu0 0.0
    %1686 = vmatpush2.msra.mxu0 0.0
    %1687 = vmatprep.subr.mxu0 0.0
    %1688 = vmatpush2.msra.mxu0 0.0
    %1689 = vmatprep.mubr.f32.mxu0 0.0
    %1690 = vmatmul.mubr.f32.gmra.mxu0 %v1318
    %v1691 = vpop.f32.mrf.mxu0
    %v1692 = vadd.f32 0.0, %v1691
    %v1693 = vpop.f32.mrf.mxu0
    %1694 = vdwg.mxu0
    %1695 = vmatprep.subr.mxu0 0.0
    %1696 = vmatpush1.msra.mxu0 %v122
    %1697 = vmatprep.subr.mxu0 0.0
    %1698 = vmatpush1.msra.mxu0 %v121
    %1699 = vmatprep.subr.mxu0 0.0
    %1700 = vmatpush1.msra.mxu0 %v120
    %1701 = vmatprep.subr.mxu0 0.0
    %1702 = vmatpush1.msra.mxu0 %v119
    %1703 = vmatprep.subr.mxu0 0.0
    %1704 = vmatpush1.msra.mxu0 %v118
    %1705 = vmatprep.subr.mxu0 0.0
    %1706 = vmatpush1.msra.mxu0 %v117
    %1707 = vmatprep.subr.mxu0 0.0
    %1708 = vmatpush1.msra.mxu0 %v116
    %1709 = vmatprep.subr.mxu0 0.0
    %1710 = vmatpush1.msra.mxu0 %v115
    %1711 = vmatprep.subr.mxu0 0.0
    %1712 = vmatpush1.msra.mxu0 %v114
    %1713 = vmatprep.subr.mxu0 0.0
    %1714 = vmatpush1.msra.mxu0 %v113
    %1715 = vmatprep.subr.mxu0 0.0
    %1716 = vmatpush1.msra.mxu0 %v112
    %1717 = vmatprep.subr.mxu0 0.0
    %1718 = vmatpush1.msra.mxu0 %v111
    %1719 = vmatprep.subr.mxu0 0.0
    %1720 = vmatpush1.msra.mxu0 %v110
    %1721 = vmatprep.subr.mxu0 0.0
    %1722 = vmatpush1.msra.mxu0 %v109
    %1723 = vmatprep.subr.mxu0 0.0
    %1724 = vmatpush1.msra.mxu0 %v108
    %1725 = vmatprep.subr.mxu0 0.0
    %1726 = vmatpush1.msra.mxu0 %v107
    %1727 = vmatprep.subr.mxu0 0.0
    %1728 = vmatpush2.msra.mxu0 0.0
    %1729 = vmatprep.subr.mxu0 0.0
    %1730 = vmatpush2.msra.mxu0 0.0
    %1731 = vmatprep.subr.mxu0 0.0
    %1732 = vmatpush2.msra.mxu0 0.0
    %1733 = vmatprep.subr.mxu0 0.0
    %1734 = vmatpush2.msra.mxu0 0.0
    %1735 = vmatprep.subr.mxu0 0.0
    %1736 = vmatpush2.msra.mxu0 0.0
    %1737 = vmatprep.subr.mxu0 0.0
    %1738 = vmatpush2.msra.mxu0 0.0
    %1739 = vmatprep.subr.mxu0 0.0
    %1740 = vmatpush2.msra.mxu0 0.0
    %1741 = vmatprep.subr.mxu0 0.0
    %1742 = vmatpush2.msra.mxu0 0.0
    %1743 = vmatprep.subr.mxu0 0.0
    %1744 = vmatpush2.msra.mxu0 0.0
    %1745 = vmatprep.subr.mxu0 0.0
    %1746 = vmatpush2.msra.mxu0 0.0
    %1747 = vmatprep.subr.mxu0 0.0
    %1748 = vmatpush2.msra.mxu0 0.0
    %1749 = vmatprep.subr.mxu0 0.0
    %1750 = vmatpush2.msra.mxu0 0.0
    %1751 = vmatprep.subr.mxu0 0.0
    %1752 = vmatpush2.msra.mxu0 0.0
    %1753 = vmatprep.subr.mxu0 0.0
    %1754 = vmatpush2.msra.mxu0 0.0
    %1755 = vmatprep.subr.mxu0 0.0
    %1756 = vmatpush2.msra.mxu0 0.0
    %1757 = vmatprep.subr.mxu0 0.0
    %1758 = vmatpush2.msra.mxu0 0.0
    %1759 = vmatprep.mubr.f32.mxu0 0.0
    %1760 = vmatmul.mubr.f32.gmra.mxu0 %v1332
    %v1761 = vpop.f32.mrf.mxu0
    %v1762 = vadd.f32 0.0, %v1761
    %v1763 = vpop.f32.mrf.mxu0
    %1764 = vdwg.mxu0
    %1765 = vmatprep.subr.mxu0 0.0
    %1766 = vmatpush1.msra.mxu0 %v138
    %1767 = vmatprep.subr.mxu0 0.0
    %1768 = vmatpush1.msra.mxu0 %v137
    %1769 = vmatprep.subr.mxu0 0.0
    %1770 = vmatpush1.msra.mxu0 %v136
    %1771 = vmatprep.subr.mxu0 0.0
    %1772 = vmatpush1.msra.mxu0 %v135
    %1773 = vmatprep.subr.mxu0 0.0
    %1774 = vmatpush1.msra.mxu0 %v134
    %1775 = vmatprep.subr.mxu0 0.0
    %1776 = vmatpush1.msra.mxu0 %v133
    %1777 = vmatprep.subr.mxu0 0.0
    %1778 = vmatpush1.msra.mxu0 %v132
    %1779 = vmatprep.subr.mxu0 0.0
    %1780 = vmatpush1.msra.mxu0 %v131
    %1781 = vmatprep.subr.mxu0 0.0
    %1782 = vmatpush1.msra.mxu0 %v130
    %1783 = vmatprep.subr.mxu0 0.0
    %1784 = vmatpush1.msra.mxu0 %v129
    %1785 = vmatprep.subr.mxu0 0.0
    %1786 = vmatpush1.msra.mxu0 %v128
    %1787 = vmatprep.subr.mxu0 0.0
    %1788 = vmatpush1.msra.mxu0 %v127
    %1789 = vmatprep.subr.mxu0 0.0
    %1790 = vmatpush1.msra.mxu0 %v126
    %1791 = vmatprep.subr.mxu0 0.0
    %1792 = vmatpush1.msra.mxu0 %v125
    %1793 = vmatprep.subr.mxu0 0.0
    %1794 = vmatpush1.msra.mxu0 %v124
    %1795 = vmatprep.subr.mxu0 0.0
    %1796 = vmatpush1.msra.mxu0 %v123
    %1797 = vmatprep.subr.mxu0 0.0
    %1798 = vmatpush2.msra.mxu0 0.0
    %1799 = vmatprep.subr.mxu0 0.0
    %1800 = vmatpush2.msra.mxu0 0.0
    %1801 = vmatprep.subr.mxu0 0.0
    %1802 = vmatpush2.msra.mxu0 0.0
    %1803 = vmatprep.subr.mxu0 0.0
    %1804 = vmatpush2.msra.mxu0 0.0
    %1805 = vmatprep.subr.mxu0 0.0
    %1806 = vmatpush2.msra.mxu0 0.0
    %1807 = vmatprep.subr.mxu0 0.0
    %1808 = vmatpush2.msra.mxu0 0.0
    %1809 = vmatprep.subr.mxu0 0.0
    %1810 = vmatpush2.msra.mxu0 0.0
    %1811 = vmatprep.subr.mxu0 0.0
    %1812 = vmatpush2.msra.mxu0 0.0
    %1813 = vmatprep.subr.mxu0 0.0
    %1814 = vmatpush2.msra.mxu0 0.0
    %1815 = vmatprep.subr.mxu0 0.0
    %1816 = vmatpush2.msra.mxu0 0.0
    %1817 = vmatprep.subr.mxu0 0.0
    %1818 = vmatpush2.msra.mxu0 0.0
    %1819 = vmatprep.subr.mxu0 0.0
    %1820 = vmatpush2.msra.mxu0 0.0
    %1821 = vmatprep.subr.mxu0 0.0
    %1822 = vmatpush2.msra.mxu0 0.0
    %1823 = vmatprep.subr.mxu0 0.0
    %1824 = vmatpush2.msra.mxu0 0.0
    %1825 = vmatprep.subr.mxu0 0.0
    %1826 = vmatpush2.msra.mxu0 0.0
    %1827 = vmatprep.subr.mxu0 0.0
    %1828 = vmatpush2.msra.mxu0 0.0
    %1829 = vmatprep.mubr.f32.mxu0 0.0
    %1830 = vmatmul.mubr.f32.gmra.mxu0 %v1334
    %v1831 = vpop.f32.mrf.mxu0
    %v1832 = vadd.f32 0.0, %v1831
    %v1833 = vpop.f32.mrf.mxu0
    %1834 = vdwg.mxu0
    %1835 = vmatprep.subr.mxu0 0.0
    %1836 = vmatpush1.msra.mxu0 %v154
    %1837 = vmatprep.subr.mxu0 0.0
    %1838 = vmatpush1.msra.mxu0 %v153
    %1839 = vmatprep.subr.mxu0 0.0
    %1840 = vmatpush1.msra.mxu0 %v152
    %1841 = vmatprep.subr.mxu0 0.0
    %1842 = vmatpush1.msra.mxu0 %v151
    %1843 = vmatprep.subr.mxu0 0.0
    %1844 = vmatpush1.msra.mxu0 %v150
    %1845 = vmatprep.subr.mxu0 0.0
    %1846 = vmatpush1.msra.mxu0 %v149
    %1847 = vmatprep.subr.mxu0 0.0
    %1848 = vmatpush1.msra.mxu0 %v148
    %1849 = vmatprep.subr.mxu0 0.0
    %1850 = vmatpush1.msra.mxu0 %v147
    %1851 = vmatprep.subr.mxu0 0.0
    %1852 = vmatpush1.msra.mxu0 %v146
    %1853 = vmatprep.subr.mxu0 0.0
    %1854 = vmatpush1.msra.mxu0 %v145
    %1855 = vmatprep.subr.mxu0 0.0
    %1856 = vmatpush1.msra.mxu0 %v144
    %1857 = vmatprep.subr.mxu0 0.0
    %1858 = vmatpush1.msra.mxu0 %v143
    %1859 = vmatprep.subr.mxu0 0.0
    %1860 = vmatpush1.msra.mxu0 %v142
    %1861 = vmatprep.subr.mxu0 0.0
    %1862 = vmatpush1.msra.mxu0 %v141
    %1863 = vmatprep.subr.mxu0 0.0
    %1864 = vmatpush1.msra.mxu0 %v140
    %1865 = vmatprep.subr.mxu0 0.0
    %1866 = vmatpush1.msra.mxu0 %v139
    %1867 = vmatprep.subr.mxu0 0.0
    %1868 = vmatpush2.msra.mxu0 0.0
    %1869 = vmatprep.subr.mxu0 0.0
    %1870 = vmatpush2.msra.mxu0 0.0
    %1871 = vmatprep.subr.mxu0 0.0
    %1872 = vmatpush2.msra.mxu0 0.0
    %1873 = vmatprep.subr.mxu0 0.0
    %1874 = vmatpush2.msra.mxu0 0.0
    %1875 = vmatprep.subr.mxu0 0.0
    %1876 = vmatpush2.msra.mxu0 0.0
    %1877 = vmatprep.subr.mxu0 0.0
    %1878 = vmatpush2.msra.mxu0 0.0
    %1879 = vmatprep.subr.mxu0 0.0
    %1880 = vmatpush2.msra.mxu0 0.0
    %1881 = vmatprep.subr.mxu0 0.0
    %1882 = vmatpush2.msra.mxu0 0.0
    %1883 = vmatprep.subr.mxu0 0.0
    %1884 = vmatpush2.msra.mxu0 0.0
    %1885 = vmatprep.subr.mxu0 0.0
    %1886 = vmatpush2.msra.mxu0 0.0
    %1887 = vmatprep.subr.mxu0 0.0
    %1888 = vmatpush2.msra.mxu0 0.0
    %1889 = vmatprep.subr.mxu0 0.0
    %1890 = vmatpush2.msra.mxu0 0.0
    %1891 = vmatprep.subr.mxu0 0.0
    %1892 = vmatpush2.msra.mxu0 0.0
    %1893 = vmatprep.subr.mxu0 0.0
    %1894 = vmatpush2.msra.mxu0 0.0
    %1895 = vmatprep.subr.mxu0 0.0
    %1896 = vmatpush2.msra.mxu0 0.0
    %1897 = vmatprep.subr.mxu0 0.0
    %1898 = vmatpush2.msra.mxu0 0.0
    %1899 = vmatprep.mubr.f32.mxu0 0.0
    %1900 = vmatmul.mubr.f32.gmra.mxu0 %v1336
    %v1901 = vpop.f32.mrf.mxu0
    %v1902 = vadd.f32 0.0, %v1901
    %v1903 = vpop.f32.mrf.mxu0
    %1904 = vdwg.mxu0
    %v1905 = vld [vmem:[%s4] sm:$0xff]
    %v1906 = vld [vmem:[%s4 + $0x8] sm:$0xff]
    %v1907 = vld [vmem:[%s4 + $0x10] sm:$0xff]
    %v1908 = vld [vmem:[%s4 + $0x18] sm:$0xff]
    %v1909 = vld [vmem:[%s5] sm:$0xff]
    %v1910 = vld [vmem:[%s5 + $0x8] sm:$0xff]
    %v1911 = vld [vmem:[%s5 + $0x10] sm:$0xff]
    %v1912 = vld [vmem:[%s5 + $0x18] sm:$0xff]
    %1913 = vmatprep.subr.mxu0 0.0
    %1914 = vmatpush1.msra.mxu0 0.0
    %1915 = vmatprep.subr.mxu0 0.0
    %1916 = vmatpush1.msra.mxu0 0.0
    %1917 = vmatprep.subr.mxu0 0.0
    %1918 = vmatpush1.msra.mxu0 0.0
    %1919 = vmatprep.subr.mxu0 0.0
    %1920 = vmatpush1.msra.mxu0 0.0
    %1921 = vmatprep.subr.mxu0 0.0
    %1922 = vmatpush1.msra.mxu0 0.0
    %1923 = vmatprep.subr.mxu0 0.0
    %1924 = vmatpush1.msra.mxu0 0.0
    %1925 = vmatprep.subr.mxu0 0.0
    %1926 = vmatpush1.msra.mxu0 0.0
    %1927 = vmatprep.subr.mxu0 0.0
    %1928 = vmatpush1.msra.mxu0 0.0
    %1929 = vmatprep.subr.mxu0 0.0
    %1930 = vmatpush1.msra.mxu0 0.0
    %1931 = vmatprep.subr.mxu0 0.0
    %1932 = vmatpush1.msra.mxu0 0.0
    %1933 = vmatprep.subr.mxu0 0.0
    %1934 = vmatpush1.msra.mxu0 0.0
    %1935 = vmatprep.subr.mxu0 0.0
    %1936 = vmatpush1.msra.mxu0 0.0
    %1937 = vmatprep.subr.mxu0 0.0
    %1938 = vmatpush1.msra.mxu0 %v1912
    %1939 = vmatprep.subr.mxu0 0.0
    %1940 = vmatpush1.msra.mxu0 %v1911
    %1941 = vmatprep.subr.mxu0 0.0
    %1942 = vmatpush1.msra.mxu0 %v1910
    %1943 = vmatprep.subr.mxu0 0.0
    %1944 = vmatpush1.msra.mxu0 %v1909
    %1945 = vmatprep.subr.mxu0 0.0
    %1946 = vmatpush2.msra.mxu0 0.0
    %1947 = vmatprep.subr.mxu0 0.0
    %1948 = vmatpush2.msra.mxu0 0.0
    %1949 = vmatprep.subr.mxu0 0.0
    %1950 = vmatpush2.msra.mxu0 0.0
    %1951 = vmatprep.subr.mxu0 0.0
    %1952 = vmatpush2.msra.mxu0 0.0
    %1953 = vmatprep.subr.mxu0 0.0
    %1954 = vmatpush2.msra.mxu0 0.0
    %1955 = vmatprep.subr.mxu0 0.0
    %1956 = vmatpush2.msra.mxu0 0.0
    %1957 = vmatprep.subr.mxu0 0.0
    %1958 = vmatpush2.msra.mxu0 0.0
    %1959 = vmatprep.subr.mxu0 0.0
    %1960 = vmatpush2.msra.mxu0 0.0
    %1961 = vmatprep.subr.mxu0 0.0
    %1962 = vmatpush2.msra.mxu0 0.0
    %1963 = vmatprep.subr.mxu0 0.0
    %1964 = vmatpush2.msra.mxu0 0.0
    %1965 = vmatprep.subr.mxu0 0.0
    %1966 = vmatpush2.msra.mxu0 0.0
    %1967 = vmatprep.subr.mxu0 0.0
    %1968 = vmatpush2.msra.mxu0 0.0
    %1969 = vmatprep.subr.mxu0 0.0
    %1970 = vmatpush2.msra.mxu0 0.0
    %1971 = vmatprep.subr.mxu0 0.0
    %1972 = vmatpush2.msra.mxu0 0.0
    %1973 = vmatprep.subr.mxu0 0.0
    %1974 = vmatpush2.msra.mxu0 0.0
    %1975 = vmatprep.subr.mxu0 0.0
    %1976 = vmatpush2.msra.mxu0 0.0
    %1977 = vmatprep.mubr.f32.mxu0 0.0
    %1978 = vmatmul.mubr.f32.gmra.mxu0 %v162
    %v1979 = vpop.f32.mrf.mxu0
    %v1980 = vadd.f32 0.0, %v1979
    %v1981 = vpop.f32.mrf.mxu0
    %1982 = vdwg.mxu0
    %v1991 = vrot.slane %v1482, 7
    %v1992 = vsel %vm1254, %v1991, %v1412
    %v1993 = vrot.slane %v1552, 6
    %v1994 = vsel %vm1257, %v1993, %v1992
    %v1995 = vrot.slane %v1622, 5
    %v1996 = vsel %vm1260, %v1995, %v1994
    %v1997 = vrot.slane %v1692, 4
    %v1998 = vsel %vm1263, %v1997, %v1996
    %v1999 = vrot.slane %v1762, 3
    %v2000 = vsel %vm1266, %v1999, %v1998
    %v2001 = vrot.slane %v1832, 2
    %v2002 = vsel %vm1269, %v2001, %v2000
    %v2003 = vrot.slane %v1902, 1
    %v2004 = vsel %vm1272, %v2003, %v2002
    %v2005 = vsel %vm160, %v2004, 0
    %2007 = vmatprep.subr.mxu0 0.0
    %2008 = vmatpush1.msra.mxu0 0.0
    %2009 = vmatprep.subr.mxu0 0.0
    %2010 = vmatpush1.msra.mxu0 0.0
    %2011 = vmatprep.subr.mxu0 0.0
    %2012 = vmatpush1.msra.mxu0 0.0
    %2013 = vmatprep.subr.mxu0 0.0
    %2014 = vmatpush1.msra.mxu0 0.0
    %2015 = vmatprep.subr.mxu0 0.0
    %2016 = vmatpush1.msra.mxu0 0.0
    %2017 = vmatprep.subr.mxu0 0.0
    %2018 = vmatpush1.msra.mxu0 0.0
    %2019 = vmatprep.subr.mxu0 0.0
    %2020 = vmatpush1.msra.mxu0 0.0
    %2021 = vmatprep.subr.mxu0 0.0
    %2022 = vmatpush1.msra.mxu0 0.0
    %2023 = vmatprep.subr.mxu0 0.0
    %2024 = vmatpush1.msra.mxu0 0.0
    %2025 = vmatprep.subr.mxu0 0.0
    %2026 = vmatpush1.msra.mxu0 0.0
    %2027 = vmatprep.subr.mxu0 0.0
    %2028 = vmatpush1.msra.mxu0 0.0
    %2029 = vmatprep.subr.mxu0 0.0
    %2030 = vmatpush1.msra.mxu0 0.0
    %2031 = vmatprep.subr.mxu0 0.0
    %2032 = vmatpush1.msra.mxu0 %v1908
    %2033 = vmatprep.subr.mxu0 0.0
    %2034 = vmatpush1.msra.mxu0 %v1907
    %2035 = vmatprep.subr.mxu0 0.0
    %2036 = vmatpush1.msra.mxu0 %v1906
    %2037 = vmatprep.subr.mxu0 0.0
    %2038 = vmatpush1.msra.mxu0 %v1905
    %2039 = vmatprep.subr.mxu0 0.0
    %2040 = vmatpush2.msra.mxu0 0.0
    %2041 = vmatprep.subr.mxu0 0.0
    %2042 = vmatpush2.msra.mxu0 0.0
    %2043 = vmatprep.subr.mxu0 0.0
    %2044 = vmatpush2.msra.mxu0 0.0
    %2045 = vmatprep.subr.mxu0 0.0
    %2046 = vmatpush2.msra.mxu0 0.0
    %2047 = vmatprep.subr.mxu0 0.0
    %2048 = vmatpush2.msra.mxu0 0.0
    %2049 = vmatprep.subr.mxu0 0.0
    %2050 = vmatpush2.msra.mxu0 0.0
    %2051 = vmatprep.subr.mxu0 0.0
    %2052 = vmatpush2.msra.mxu0 0.0
    %2053 = vmatprep.subr.mxu0 0.0
    %2054 = vmatpush2.msra.mxu0 0.0
    %2055 = vmatprep.subr.mxu0 0.0
    %2056 = vmatpush2.msra.mxu0 0.0
    %2057 = vmatprep.subr.mxu0 0.0
    %2058 = vmatpush2.msra.mxu0 0.0
    %2059 = vmatprep.subr.mxu0 0.0
    %2060 = vmatpush2.msra.mxu0 0.0
    %2061 = vmatprep.subr.mxu0 0.0
    %2062 = vmatpush2.msra.mxu0 0.0
    %2063 = vmatprep.subr.mxu0 0.0
    %2064 = vmatpush2.msra.mxu0 0.0
    %2065 = vmatprep.subr.mxu0 0.0
    %2066 = vmatpush2.msra.mxu0 0.0
    %2067 = vmatprep.subr.mxu0 0.0
    %2068 = vmatpush2.msra.mxu0 0.0
    %2069 = vmatprep.subr.mxu0 0.0
    %2070 = vmatpush2.msra.mxu0 0.0
    %2071 = vmatprep.mubr.f32.mxu0 0.0
    %2072 = vmatmul.mubr.f32.gmra.mxu0 %v2005
    %v2073 = vpop.f32.mrf.mxu0
    %v2074 = vadd.f32 %v1980, %v2073
    %v2075 = vpop.f32.mrf.mxu0
    %2076 = vdwg.mxu0
    %v2077 = vtanh.pop %v2074
    %2078 = vst [vmem:[#allocation2] sm:$0xff] %v2077
    %2079 = vst [vmem:[%s7] sm:$0xff] %v1286
    // Predicated region
    $region26: #{attention_layer.1} parent=1 // pred_check
      _
    $region27: #{attention_layer.1} parent=1 // pred_check_branch
      %2081 = sbr.rel (0) target = $region29
    $region28: #{attention_layer.1} parent=1 // pred_region
      %s2083 = ssub.s32 128, 128
      %2084 = vsyncadd [#allocation3], %s2083
      %s2086 = sshll.u32 [#allocation2], 4
      %s2087 = int_to_ptr.vmem [resolvable:$true] %s2086
      %2089 = dma.vmem_to_hbm [thread:$0]  %s2087, 128, %s6, [#allocation3]
    $region29: #{attention_layer.1} parent=1 // pred_fallthru
      _
    // Predicated region
    $region30: #{attention_layer.1} parent=1 // pred_check
      _
    $region31: #{attention_layer.1} parent=1 // pred_check_branch
      %2091 = sbr.rel (0) target = $region33
    $region32: #{attention_layer.1} parent=1 // pred_region
      _
    $region33: #{attention_layer.1} parent=1 // pred_fallthru
      _
    // Predicated region
    $region34: #{attention_layer.1} parent=1 // pred_check
      _
    $region35: #{attention_layer.1} parent=1 // pred_check_branch
      %2093 = sbr.rel (0) target = $region37
    $region36: #{attention_layer.1} parent=1 // pred_region
      %2094 = dma.done [#allocation3], 128
    $region37: #{attention_layer.1} parent=1 // pred_fallthru
      _
    // Predicated region
    $region38: #{attention_layer.1} parent=1 // pred_check
      _
    $region39: #{attention_layer.1} parent=1 // pred_check_branch
      %2096 = sbr.rel (0) target = $region41
    $region40: #{attention_layer.1} parent=1 // pred_region
      _
    $region41: #{attention_layer.1} parent=1 // pred_fallthru
      _
    %2097 = vsyncpa [#allocation3], 1

</llo_original>
